<compile_context>
chip_gen: v5e
topology: v5e:2x2
jax: 0.10.0
libtpu: 0.0.40
codegen_flags: <defaults>
</compile_context>

<pallas_src>
import jax
import jax.numpy as jnp
from jax.experimental import pallas as pl
from jax.experimental.pallas import tpu as pltpu


def mlp_kernel(x_ref, w1_ref, b1_ref, w2_ref, b2_ref, w3_ref, b3_ref, o_ref):
    """Fused packed MLP on one (tr, G*d_in) tile of packed batch rows.

    Layers 1-2: bf16 MXU matmuls against block-diagonal packed weights, f32
    accumulation, bias+ReLU in f32 on the VPU.  Layer 3: block-diagonal
    (G*h2, G) matmul == per-group segmented reduce done on the MXU, emitting a
    (tr, G) tile directly (no sublane->lane relayout in the epilogue)."""
    x = x_ref[...].astype(w1_ref.dtype)                 # f32 -> bf16 in-kernel
    h = jnp.dot(x, w1_ref[...], preferred_element_type=jnp.float32)
    h = jnp.maximum(h + b1_ref[...], 0.0)               # bias + ReLU in f32 (VPU)
    h = jnp.dot(h.astype(w2_ref.dtype), w2_ref[...],
                preferred_element_type=jnp.float32)
    h = jnp.maximum(h + b2_ref[...], 0.0)
    y = jnp.dot(h.astype(w3_ref.dtype), w3_ref[...],    # segmented reduce on MXU
                preferred_element_type=jnp.float32)
    o_ref[...] = (y + b3_ref[0]).astype(o_ref.dtype)    # b3 scalar from SMEM


def _round_up(x: int, m: int) -> int:
    return (x + m - 1) // m * m


def _block_diag(w, G):
    """(k, n) -> (G*k, G*n) block-diagonal with `w` repeated on the diagonal."""
    k, n = w.shape
    eye = jnp.eye(G, dtype=w.dtype)
    return (eye[:, None, :, None] * w[None, :, None, :]).reshape(G * k, G * n)


def _choose_packing(d_in, h1, h2):
    # Pack G batch rows so the layer-1 contraction fills the 128 MXU lanes.
    # (On v5e's 128-wide MXU, G=4 avoids the two-column pass at N=256; G=8 is
    # still a large net win there, so it stays the default.)  Cap G so the
    # packed W2 (G*h1, G*h2) bf16 stays small.
    G = max(1, min(8, 128 // max(d_in, 1)))
    while G > 1 and G * G * h1 * h2 * 2 > (4 << 20):
        G //= 2
    return G


def _choose_tr(R):
    # Packed rows per grid step (tr*G batch rows).  Large tiles amortize the
    # ~0.35us per-grid-step overhead (dominant once the MXU work is packed
    # down); cap at 256 packed rows (2048 batch rows with G=8) and aim for
    # >=4 steps so the "parallel" batch axis can shard across v7x's two TCs.
    tr = _round_up(pl.cdiv(R, 4), 8)
    tr = max(16, min(256, tr))
    return min(tr, R)


def pack_params(params, *, G=None, compute_dtype=jnp.bfloat16):
    """Build the block-diagonal packed weights ONCE, outside the kernel."""
    (w1, b1), (w2, b2), (w3, b3) = params
    d_in, h1 = w1.shape
    h2 = w2.shape[1]
    if G is None:
        G = _choose_packing(d_in, h1, h2)
    return dict(
        G=G, d_in=d_in, h1=h1, h2=h2,
        w1p=_block_diag(w1, G).astype(compute_dtype),        # (G*d_in, G*h1)
        b1p=jnp.tile(b1.reshape(1, h1), (1, G)),              # (1, G*h1) f32
        w2p=_block_diag(w2, G).astype(compute_dtype),        # (G*h1, G*h2)
        b2p=jnp.tile(b2.reshape(1, h2), (1, G)),              # (1, G*h2) f32
        w3p=_block_diag(w3, G).astype(compute_dtype),        # (G*h2, G)
        b3s=b3.reshape(1).astype(jnp.float32),                 # scalar -> SMEM
    )


def feed_forward_regressor(x, packed, *, tr=None):
    """Pallas forward pass. x: (B, d_in) f32. Returns (B,) f32."""
    G, d_in, h1, h2 = packed["G"], packed["d_in"], packed["h1"], packed["h2"]
    w1p, b1p = packed["w1p"], packed["b1p"]
    w2p, b2p = packed["w2p"], packed["b2p"]
    w3p, b3s = packed["w3p"], packed["b3s"]

    B, d = x.shape
    assert d == d_in, f"expected d_in={d_in}, got {d}"

    # Pad only to packed-row/sublane granularity (8*G rows).  For batches that
    # are already a multiple of 8*G there is NO wrapper-side HBM pass over x;
    # raggedness w.r.t. the tile size is handled by Pallas partial blocks and
    # the padded rows are sliced away below.
    Bp = _round_up(B, 8 * G)
    if Bp != B:
        x = jnp.pad(x, ((0, Bp - B), (0, 0)))
    R = Bp // G
    x_p = x.reshape(R, G * d_in)                # free: row-major contiguous, f32

    if tr is None:
        tr = _choose_tr(R)
    else:
        tr = min(max(_round_up(tr, 8), 8), R)   # keep (8, .)-legal blocks
    grid = (pl.cdiv(R, tr),)

    flops = 2 * Bp * (d_in * h1 + h1 * h2 + h2)        # logical (useful) flops
    bytes_accessed = (x_p.size * 4
                      + w1p.size * 2 + w2p.size * 2 + w3p.size * 2
                      + b1p.size * 4 + b2p.size * 4 + 4
                      + R * G * 4)

    def call(weight_mode):
        kw = {} if weight_mode is None else {"pipeline_mode": weight_mode}
        const2 = lambda i: (0, 0)
        return pl.pallas_call(
            mlp_kernel,
            out_shape=jax.ShapeDtypeStruct((R, G), jnp.float32),
            grid_spec=pltpu.PrefetchScalarGridSpec(
                num_scalar_prefetch=0,
                grid=grid,
                in_specs=[
                    pl.BlockSpec((tr, G * d_in), lambda i: (i, 0)),     # x tile (f32)
                    pl.BlockSpec((G * d_in, G * h1), const2, **kw),     # W1 block-diag
                    pl.BlockSpec((1, G * h1), const2, **kw),            # b1 tiled
                    pl.BlockSpec((G * h1, G * h2), const2, **kw),       # W2 block-diag
                    pl.BlockSpec((1, G * h2), const2, **kw),            # b2 tiled
                    pl.BlockSpec((G * h2, G), const2, **kw),            # W3 block-diag cols
                    pl.BlockSpec(memory_space=pltpu.MemorySpace.SMEM),  # b3 scalar
                ],
                out_specs=pl.BlockSpec((tr, G), lambda i: (i, 0)),
            ),
            compiler_params=pltpu.CompilerParams(
                dimension_semantics=("parallel",)),
            cost_estimate=pl.CostEstimate(
                flops=int(flops), transcendentals=0,
                bytes_accessed=int(bytes_accessed)),
        )(x_p, w1p, b1p, w2p, b2p, w3p, b3s)

    try:
        out = call(pl.Buffered(1))   # single-buffer the resident weights/biases
    except Exception:                # pipeline_mode single-buffering unavailable
        out = call(None)

    return out.reshape(Bp)[:B]       # free reshape; mirrors .squeeze(1)


def init_params(key, d_in, hidden):
    """PyTorch nn.Linear-style init: U(-1/sqrt(fan_in), 1/sqrt(fan_in)).
    Weights stored (in, out) so the math is y = x @ W + b."""
    dims = [d_in] + list(hidden) + [1]
    params = []
    for fan_in, fan_out in zip(dims[:-1], dims[1:]):
        key, kw, kb = jax.random.split(key, 3)
        bound = 1.0 / float(fan_in) ** 0.5
        w = jax.random.uniform(kw, (fan_in, fan_out), jnp.float32, -bound, bound)
        b = jax.random.uniform(kb, (1, fan_out), jnp.float32, -bound, bound)
        params.append((w, b))
    return params


def reference(x, params, compute_dtype=jnp.float32):
    """Pure-JAX reference. compute_dtype mirrors the kernel's MXU operand dtype."""
    (w1, b1), (w2, b2), (w3, b3) = params
    cd = compute_dtype
    h = jnp.maximum(jnp.dot(x.astype(cd), w1.astype(cd),
                            preferred_element_type=jnp.float32) + b1, 0.0)
    h = jnp.maximum(jnp.dot(h.astype(cd), w2.astype(cd),
                            preferred_element_type=jnp.float32) + b2, 0.0)
    y = jnp.dot(h.astype(cd), w3.astype(cd),
                preferred_element_type=jnp.float32) + b3
    return y[:, 0]


if __name__ == "__main__":
    d_in, hidden = 16, (32, 32)
    key = jax.random.PRNGKey(0)
    key, kx = jax.random.split(key)
    params = init_params(key, d_in, hidden)
    packed = pack_params(params)        # block-diagonal weights built once

    # Case 1: batch multiple of 8*G -> zero wrapper HBM passes, 2 parallel steps.
    batch = 256
    x = jax.random.normal(kx, (batch, d_in), jnp.float32)
    y = jax.block_until_ready(feed_forward_regressor(x, packed))
    assert y.shape == (batch,)
    # Tight check vs a reference mirroring the kernel's bf16 MXU operands,
    # loose check vs the pure-f32 PyTorch-equivalent reference.
    assert jnp.allclose(y, reference(x, params, jnp.bfloat16), atol=2e-3, rtol=2e-3)
    assert jnp.allclose(y, reference(x, params, jnp.float32), atol=3e-2, rtol=3e-2)

    # Case 2: ragged batch (exercises the pad-to-8*G path + partial tile).
    batch2 = 100
    x2 = jax.random.normal(jax.random.PRNGKey(1), (batch2, d_in), jnp.float32)
    y2 = jax.block_until_ready(feed_forward_regressor(x2, packed))
    assert y2.shape == (batch2,)
    assert jnp.allclose(y2, reference(x2, params, jnp.bfloat16), atol=2e-3, rtol=2e-3)

    print("KERNEL_OK")
</pallas_src>

<mosaic_0001>
module attributes {stable_mosaic.version = 11 : i64} {
  func.func @mlp_kernel(%arg0: i32, %arg1: memref<16x128xf32, #tpu.memory_space<vmem>>, %arg2: memref<128x256xbf16, #tpu.memory_space<vmem>>, %arg3: memref<1x256xf32, #tpu.memory_space<vmem>>, %arg4: memref<256x256xbf16, #tpu.memory_space<vmem>>, %arg5: memref<1x256xf32, #tpu.memory_space<vmem>>, %arg6: memref<256x8xbf16, #tpu.memory_space<vmem>>, %arg7: memref<1xf32, #tpu.memory_space<smem>>, %arg8: memref<16x8xf32, #tpu.memory_space<vmem>>) attributes {dimension_semantics = [#tpu.dimension_semantics<parallel>], iteration_bounds = array<i64: 2>, scalar_prefetch = 0 : i64, scratch_operands = 0 : i64, tpu.core_type = #tpu.core_type<tc>, window_params = [{transform_indices = @transform_0, window_bounds = array<i64: 16, 128>}, {pipeline_mode = #tpu.pipeline_mode<synchronous>, transform_indices = @transform_1, window_bounds = array<i64: 128, 256>}, {pipeline_mode = #tpu.pipeline_mode<synchronous>, transform_indices = @transform_2, window_bounds = array<i64: 1, 256>}, {pipeline_mode = #tpu.pipeline_mode<synchronous>, transform_indices = @transform_3, window_bounds = array<i64: 256, 256>}, {pipeline_mode = #tpu.pipeline_mode<synchronous>, transform_indices = @transform_4, window_bounds = array<i64: 1, 256>}, {pipeline_mode = #tpu.pipeline_mode<synchronous>, transform_indices = @transform_5, window_bounds = array<i64: 256, 8>}, {transform_indices = @transform_6, window_bounds = array<i64: 1>}, {transform_indices = @transform_7, window_bounds = array<i64: 16, 8>}]} {
    %c0 = arith.constant 0 : index
    %c0_0 = arith.constant 0 : index
    %0 = vector.load %arg1[%c0, %c0_0] : memref<16x128xf32, #tpu.memory_space<vmem>>, vector<16x128xf32>
    %1 = arith.truncf %0 : vector<16x128xf32> to vector<16x128xbf16>
    %c0_1 = arith.constant 0 : index
    %c0_2 = arith.constant 0 : index
    %2 = vector.load %arg2[%c0_1, %c0_2] : memref<128x256xbf16, #tpu.memory_space<vmem>>, vector<128x256xbf16>
    %cst = arith.constant dense<0.000000e+00> : vector<16x256xf32>
    %3 = tpu.matmul %1, %2, %cst {dimension_numbers = #tpu.dot_dimension_numbers<[1], [0], [0], [1], [0, 0, 1, 1], [], []>} : vector<16x128xbf16>, vector<128x256xbf16>, vector<16x256xf32> -> vector<16x256xf32>
    %c0_3 = arith.constant 0 : index
    %c0_4 = arith.constant 0 : index
    %4 = vector.load %arg3[%c0_3, %c0_4] : memref<1x256xf32, #tpu.memory_space<vmem>>, vector<1x256xf32>
    %5 = vector.broadcast %4 : vector<1x256xf32> to vector<16x256xf32>
    %6 = arith.addf %3, %5 : vector<16x256xf32>
    %cst_5 = arith.constant 0.000000e+00 : f32
    %7 = vector.broadcast %cst_5 : f32 to vector<16x256xf32>
    %8 = arith.maximumf %6, %7 : vector<16x256xf32>
    %9 = arith.truncf %8 : vector<16x256xf32> to vector<16x256xbf16>
    %c0_6 = arith.constant 0 : index
    %c0_7 = arith.constant 0 : index
    %10 = vector.load %arg4[%c0_6, %c0_7] : memref<256x256xbf16, #tpu.memory_space<vmem>>, vector<256x256xbf16>
    %cst_8 = arith.constant dense<0.000000e+00> : vector<16x256xf32>
    %11 = tpu.matmul %9, %10, %cst_8 {dimension_numbers = #tpu.dot_dimension_numbers<[1], [0], [0], [1], [0, 0, 1, 1], [], []>} : vector<16x256xbf16>, vector<256x256xbf16>, vector<16x256xf32> -> vector<16x256xf32>
    %c0_9 = arith.constant 0 : index
    %c0_10 = arith.constant 0 : index
    %12 = vector.load %arg5[%c0_9, %c0_10] : memref<1x256xf32, #tpu.memory_space<vmem>>, vector<1x256xf32>
    %13 = vector.broadcast %12 : vector<1x256xf32> to vector<16x256xf32>
    %14 = arith.addf %11, %13 : vector<16x256xf32>
    %cst_11 = arith.constant 0.000000e+00 : f32
    %15 = vector.broadcast %cst_11 : f32 to vector<16x256xf32>
    %16 = arith.maximumf %14, %15 : vector<16x256xf32>
    %17 = arith.truncf %16 : vector<16x256xf32> to vector<16x256xbf16>
    %c0_12 = arith.constant 0 : index
    %c0_13 = arith.constant 0 : index
    %18 = vector.load %arg6[%c0_12, %c0_13] : memref<256x8xbf16, #tpu.memory_space<vmem>>, vector<256x8xbf16>
    %cst_14 = arith.constant dense<0.000000e+00> : vector<16x8xf32>
    %19 = tpu.matmul %17, %18, %cst_14 {dimension_numbers = #tpu.dot_dimension_numbers<[1], [0], [0], [1], [0, 0, 1, 1], [], []>} : vector<16x256xbf16>, vector<256x8xbf16>, vector<16x8xf32> -> vector<16x8xf32>
    %c0_15 = arith.constant 0 : index
    %20 = memref.load %arg7[%c0_15] : memref<1xf32, #tpu.memory_space<smem>>
    %21 = vector.broadcast %20 : f32 to vector<16x8xf32>
    %22 = arith.addf %19, %21 : vector<16x8xf32>
    %c0_16 = arith.constant 0 : index
    %c0_17 = arith.constant 0 : index
    %23 = vector.load %arg8[%c0_16, %c0_17] : memref<16x8xf32, #tpu.memory_space<vmem>>, vector<16x8xf32>
    tpu.vector_store %arg8[%c0_16, %c0_17], %22 {strides = array<i32>} : memref<16x8xf32, #tpu.memory_space<vmem>>, vector<16x8xf32>,
    return
  }
  func.func @transform_0(%arg0: i32) -> (i32, i32) {
    %c0_i32 = arith.constant 0 : i32
    %c0_i32_0 = arith.constant 0 : i32
    return %arg0, %c0_i32 : i32, i32
  }
  func.func @transform_1(%arg0: i32) -> (i32, i32) {
    %c0_i32 = arith.constant 0 : i32
    %c0_i32_0 = arith.constant 0 : i32
    %c0_i32_1 = arith.constant 0 : i32
    return %c0_i32, %c0_i32_0 : i32, i32
  }
  func.func @transform_2(%arg0: i32) -> (i32, i32) {
    %c0_i32 = arith.constant 0 : i32
    %c0_i32_0 = arith.constant 0 : i32
    %c0_i32_1 = arith.constant 0 : i32
    return %c0_i32, %c0_i32_0 : i32, i32
  }
  func.func @transform_3(%arg0: i32) -> (i32, i32) {
    %c0_i32 = arith.constant 0 : i32
    %c0_i32_0 = arith.constant 0 : i32
    %c0_i32_1 = arith.constant 0 : i32
    return %c0_i32, %c0_i32_0 : i32, i32
  }
  func.func @transform_4(%arg0: i32) -> (i32, i32) {
    %c0_i32 = arith.constant 0 : i32
    %c0_i32_0 = arith.constant 0 : i32
    %c0_i32_1 = arith.constant 0 : i32
    return %c0_i32, %c0_i32_0 : i32, i32
  }
  func.func @transform_5(%arg0: i32) -> (i32, i32) {
    %c0_i32 = arith.constant 0 : i32
    %c0_i32_0 = arith.constant 0 : i32
    %c0_i32_1 = arith.constant 0 : i32
    return %c0_i32, %c0_i32_0 : i32, i32
  }
  func.func @transform_6(%arg0: i32) -> i32 {
    %c0_i32 = arith.constant 0 : i32
    %c0_i32_0 = arith.constant 0 : i32
    return %c0_i32 : i32
  }
  func.func @transform_7(%arg0: i32) -> (i32, i32) {
    %c0_i32 = arith.constant 0 : i32
    %c0_i32_0 = arith.constant 0 : i32
    return %arg0, %c0_i32 : i32, i32
  }
}

module attributes {stable_mosaic.version = 11 : i64} {
  func.func @mlp_kernel(%arg0: i32, %arg1: memref<16x128xf32, #tpu.memory_space<vmem>>, %arg2: memref<128x256xbf16, #tpu.memory_space<vmem>>, %arg3: memref<1x256xf32, #tpu.memory_space<vmem>>, %arg4: memref<256x256xbf16, #tpu.memory_space<vmem>>, %arg5: memref<1x256xf32, #tpu.memory_space<vmem>>, %arg6: memref<256x8xbf16, #tpu.memory_space<vmem>>, %arg7: memref<1xf32, #tpu.memory_space<smem>>, %arg8: memref<16x8xf32, #tpu.memory_space<vmem>>) attributes {dimension_semantics = [#tpu.dimension_semantics<parallel>], iteration_bounds = array<i64: 2>, scalar_prefetch = 0 : i64, scratch_operands = 0 : i64, tpu.core_type = #tpu.core_type<tc>, window_params = [{transform_indices = @transform_0, window_bounds = array<i64: 16, 128>}, {pipeline_mode = #tpu.pipeline_mode<synchronous>, transform_indices = @transform_1, window_bounds = array<i64: 128, 256>}, {pipeline_mode = #tpu.pipeline_mode<synchronous>, transform_indices = @transform_2, window_bounds = array<i64: 1, 256>}, {pipeline_mode = #tpu.pipeline_mode<synchronous>, transform_indices = @transform_3, window_bounds = array<i64: 256, 256>}, {pipeline_mode = #tpu.pipeline_mode<synchronous>, transform_indices = @transform_4, window_bounds = array<i64: 1, 256>}, {pipeline_mode = #tpu.pipeline_mode<synchronous>, transform_indices = @transform_5, window_bounds = array<i64: 256, 8>}, {transform_indices = @transform_6, window_bounds = array<i64: 1>}, {transform_indices = @transform_7, window_bounds = array<i64: 16, 8>}]} {
    %c0 = arith.constant 0 : index
    %c0_0 = arith.constant 0 : index
    %0 = vector.load %arg1[%c0, %c0_0] : memref<16x128xf32, #tpu.memory_space<vmem>>, vector<16x128xf32>
    %1 = arith.truncf %0 : vector<16x128xf32> to vector<16x128xbf16>
    %c0_1 = arith.constant 0 : index
    %c0_2 = arith.constant 0 : index
    %2 = vector.load %arg2[%c0_1, %c0_2] : memref<128x256xbf16, #tpu.memory_space<vmem>>, vector<128x256xbf16>
    %cst = arith.constant dense<0.000000e+00> : vector<16x256xf32>
    %3 = tpu.matmul %1, %2, %cst {dimension_numbers = #tpu.dot_dimension_numbers<[1], [0], [0], [1], [0, 0, 1, 1], [], []>} : vector<16x128xbf16>, vector<128x256xbf16>, vector<16x256xf32> -> vector<16x256xf32>
    %c0_3 = arith.constant 0 : index
    %c0_4 = arith.constant 0 : index
    %4 = vector.load %arg3[%c0_3, %c0_4] : memref<1x256xf32, #tpu.memory_space<vmem>>, vector<1x256xf32>
    %5 = vector.broadcast %4 : vector<1x256xf32> to vector<16x256xf32>
    %6 = arith.addf %3, %5 : vector<16x256xf32>
    %cst_5 = arith.constant 0.000000e+00 : f32
    %7 = vector.broadcast %cst_5 : f32 to vector<16x256xf32>
    %8 = arith.maximumf %6, %7 : vector<16x256xf32>
    %9 = arith.truncf %8 : vector<16x256xf32> to vector<16x256xbf16>
    %c0_6 = arith.constant 0 : index
    %c0_7 = arith.constant 0 : index
    %10 = vector.load %arg4[%c0_6, %c0_7] : memref<256x256xbf16, #tpu.memory_space<vmem>>, vector<256x256xbf16>
    %cst_8 = arith.constant dense<0.000000e+00> : vector<16x256xf32>
    %11 = tpu.matmul %9, %10, %cst_8 {dimension_numbers = #tpu.dot_dimension_numbers<[1], [0], [0], [1], [0, 0, 1, 1], [], []>} : vector<16x256xbf16>, vector<256x256xbf16>, vector<16x256xf32> -> vector<16x256xf32>
    %c0_9 = arith.constant 0 : index
    %c0_10 = arith.constant 0 : index
    %12 = vector.load %arg5[%c0_9, %c0_10] : memref<1x256xf32, #tpu.memory_space<vmem>>, vector<1x256xf32>
    %13 = vector.broadcast %12 : vector<1x256xf32> to vector<16x256xf32>
    %14 = arith.addf %11, %13 : vector<16x256xf32>
    %cst_11 = arith.constant 0.000000e+00 : f32
    %15 = vector.broadcast %cst_11 : f32 to vector<16x256xf32>
    %16 = arith.maximumf %14, %15 : vector<16x256xf32>
    %17 = arith.truncf %16 : vector<16x256xf32> to vector<16x256xbf16>
    %c0_12 = arith.constant 0 : index
    %c0_13 = arith.constant 0 : index
    %18 = vector.load %arg6[%c0_12, %c0_13] : memref<256x8xbf16, #tpu.memory_space<vmem>>, vector<256x8xbf16>
    %cst_14 = arith.constant dense<0.000000e+00> : vector<16x8xf32>
    %19 = tpu.matmul %17, %18, %cst_14 {dimension_numbers = #tpu.dot_dimension_numbers<[1], [0], [0], [1], [0, 0, 1, 1], [], []>} : vector<16x256xbf16>, vector<256x8xbf16>, vector<16x8xf32> -> vector<16x8xf32>
    %c0_15 = arith.constant 0 : index
    %20 = memref.load %arg7[%c0_15] : memref<1xf32, #tpu.memory_space<smem>>
    %21 = vector.broadcast %20 : f32 to vector<16x8xf32>
    %22 = arith.addf %19, %21 : vector<16x8xf32>
    %c0_16 = arith.constant 0 : index
    %c0_17 = arith.constant 0 : index
    %23 = vector.load %arg8[%c0_16, %c0_17] : memref<16x8xf32, #tpu.memory_space<vmem>>, vector<16x8xf32>
    tpu.vector_store %arg8[%c0_16, %c0_17], %22 {strides = array<i32>} : memref<16x8xf32, #tpu.memory_space<vmem>>, vector<16x8xf32>,
    return
  }
  func.func @transform_0(%arg0: i32) -> (i32, i32) {
    %c0_i32 = arith.constant 0 : i32
    %c0_i32_0 = arith.constant 0 : i32
    return %arg0, %c0_i32 : i32, i32
  }
  func.func @transform_1(%arg0: i32) -> (i32, i32) {
    %c0_i32 = arith.constant 0 : i32
    %c0_i32_0 = arith.constant 0 : i32
    %c0_i32_1 = arith.constant 0 : i32
    return %c0_i32, %c0_i32_0 : i32, i32
  }
  func.func @transform_2(%arg0: i32) -> (i32, i32) {
    %c0_i32 = arith.constant 0 : i32
    %c0_i32_0 = arith.constant 0 : i32
    %c0_i32_1 = arith.constant 0 : i32
    return %c0_i32, %c0_i32_0 : i32, i32
  }
  func.func @transform_3(%arg0: i32) -> (i32, i32) {
    %c0_i32 = arith.constant 0 : i32
    %c0_i32_0 = arith.constant 0 : i32
    %c0_i32_1 = arith.constant 0 : i32
    return %c0_i32, %c0_i32_0 : i32, i32
  }
  func.func @transform_4(%arg0: i32) -> (i32, i32) {
    %c0_i32 = arith.constant 0 : i32
    %c0_i32_0 = arith.constant 0 : i32
    %c0_i32_1 = arith.constant 0 : i32
    return %c0_i32, %c0_i32_0 : i32, i32
  }
  func.func @transform_5(%arg0: i32) -> (i32, i32) {
    %c0_i32 = arith.constant 0 : i32
    %c0_i32_0 = arith.constant 0 : i32
    %c0_i32_1 = arith.constant 0 : i32
    return %c0_i32, %c0_i32_0 : i32, i32
  }
  func.func @transform_6(%arg0: i32) -> i32 {
    %c0_i32 = arith.constant 0 : i32
    %c0_i32_0 = arith.constant 0 : i32
    return %c0_i32 : i32
  }
  func.func @transform_7(%arg0: i32) -> (i32, i32) {
    %c0_i32 = arith.constant 0 : i32
    %c0_i32_0 = arith.constant 0 : i32
    return %arg0, %c0_i32 : i32, i32
  }
}

</mosaic_0001>

<llo_original>
// kernel: tpu_custom_call.1
$region0: #{tpu_custom_call.1}
  #allocation0 [shape = 'u32[]', space=smem, size = 0x4, offset = 0x4, fixed_abs, tag = 'smem constant byte address 0x4 - core index']
  #allocation1 [shape = 'u32[72,128]{1,0:T(1,128)}', space=vmem, size = 0x9000, scoped, tag = 'internal scratch']
  #allocation2 [shape = 'f32[1]{0:T(128)S(6)}', space=smem, size = 0x200, scoped, tag = 'scoped memory for tpu_custom_call.1']
  %s0 = inlined_call_operand.hbm [shape: f32[32,128], index: 0, kind: input, shape index: {}]
  %s1 = inlined_call_operand.vmem [shape: bf16[128,256], index: 1, kind: input, shape index: {}]
  %s2 = inlined_call_operand.vmem [shape: f32[1,256], index: 2, kind: input, shape index: {}]
  %s3 = inlined_call_operand.hbm [shape: bf16[256,256], index: 3, kind: input, shape index: {}]
  %s4 = inlined_call_operand.vmem [shape: f32[1,256], index: 4, kind: input, shape index: {}]
  %s5 = inlined_call_operand.vmem [shape: bf16[256,8], index: 5, kind: input, shape index: {}]
  %s6 = inlined_call_operand.<no memory space> [shape: f32[1], index: 6, kind: input, shape index: {}]
  %s7 = inlined_call_operand.vmem [shape: f32[32,8], index: 7, kind: output, shape index: {}]
  %s8 = sld [smem:[#allocation0]]
  $region69: #{tpu_custom_call.1} parent=0
    _
  %s10 = ssub.s32 1, %s8
  %s11 = scalar_select 0, %s10, %s8
  %12 = sst [smem:[#allocation2]] %s6
  $region1: #{tpu_custom_call.1} parent=0
    #allocation3 [shape = 'u8[16384]{0}', space=vmem, size = 0x4000, scoped, tag = 'input window, operand 0']
    #allocation4 [shape = 's32[2]{0}', space=sflag, size = 0x8, scoped, tag = 'scoped memory for tpu_custom_call.1']
    #allocation5 [shape = 'u8[131072]{0}', space=vmem, size = 0x20000, scoped, tag = 'input window, operand 3, single buffered']
    #allocation6 [shape = 's32[1]{0}', space=sflag, size = 0x4, scoped, tag = 'scoped memory for tpu_custom_call.1']
    %13 = vsyncpa [#allocation4], 0
    %s14 = scalar_lea.sflag [#allocation4], 1
    %15 = vsyncpa %s14, 0
    %16 = vsyncpa [#allocation6], 0
    loop: start=0, step=1, limit=4
    $region2: #{tpu_custom_call.1} parent=1 // loop_pre_header
      _
    $region3: #{tpu_custom_call.1} parent=1 // loop_header
      %s18 = sphi 0, %s22
      %p19 = scmp.ge.s32.totalorder %s18, 4
      %s28 = sphi 0, %s30
      %s31 = sphi 0, %s28
      %s32 = sphi 0, %s31
      %s48 = sphi 0, %s32
      %s52 = sphi 0, %s52
      %s54 = sphi 0, %s52
      %s55 = sphi 0, %s54
      %s69 = sphi 0, %s55
      %s73 = sphi 0, %s73
      %s75 = sphi 0, %s73
      %s76 = sphi 0, %s75
      %s90 = sphi 0, %s76
      %s94 = sphi 0, %s94
      %s96 = sphi 0, %s94
      %s97 = sphi 0, %s96
      %s111 = sphi 0, %s97
      %s115 = sphi 0, %s115
      %s117 = sphi 0, %s115
      %s118 = sphi 0, %s117
      %s132 = sphi 0, %s118
      %s136 = sphi 0, %s136
      %s138 = sphi 0, %s136
      %s139 = sphi 0, %s138
      %s153 = sphi 0, %s139
      %s157 = sphi 0, %s157
      %s159 = sphi 0, %s157
      %s160 = sphi 0, %s159
      %s174 = sphi 0, %s160
      %s180 = sphi 0, %s182
      %s183 = sphi 0, %s180
      %s184 = sphi 0, %s183
      %s200 = sphi 0, %s184
    $region4: #{tpu_custom_call.1} parent=1 // loop_header_branch
      %21 = sbr.rel (%p19) target = $region8
    $region5: #{tpu_custom_call.1} parent=1 // loop_body
      %s23 = ssub.s32 %s18, 1
      %s24 = ssub.s32 %s18, 2
      %s25 = sadd.s32 %s18, 1
      %s26 = ssub.s32 %s18, %s25
      %p27 = scmp.eq.s32.totalorder %s26, 0
      %s29 = sadd.s32 %s28, 1
      %s30 = scalar_select %p27, %s28, %s29
      %p33 = pneg %p27
      %p34 = scmp.eq.s32.totalorder %s18, 1
      %p35 = por %p33, %p34
      %p36 = scmp.ne.s32.totalorder %s28, %s31
      %p37 = scmp.eq.s32.totalorder %s18, 0
      %p38 = por %p36, %p37
      %p39 = scmp.ne.s32.totalorder %s28, %s31
      %p40 = scmp.eq.s32.totalorder %s23, 1
      %p41 = por %p39, %p40
      %p42 = scmp.ne.s32.totalorder %s31, %s32
      %p43 = scmp.eq.s32.totalorder %s23, 0
      %p44 = por %p42, %p43
      %p45 = scmp.ne.s32.totalorder %s31, %s32
      %p46 = scmp.eq.s32.totalorder %s24, 1
      %p47 = por %p45, %p46
      %p49 = scmp.ne.s32.totalorder %s32, %s48
      %p50 = scmp.eq.s32.totalorder %s24, 0
      %p51 = por %p49, %p50
      %s53 = sadd.s32 %s52, 1
      %p56 = scmp.eq.s32.totalorder %s18, 1
      %p57 = scmp.ne.s32.totalorder %s52, %s54
      %p58 = scmp.eq.s32.totalorder %s18, 0
      %p59 = por %p57, %p58
      %p60 = scmp.ne.s32.totalorder %s52, %s54
      %p61 = scmp.eq.s32.totalorder %s23, 1
      %p62 = por %p60, %p61
      %p63 = scmp.ne.s32.totalorder %s54, %s55
      %p64 = scmp.eq.s32.totalorder %s23, 0
      %p65 = por %p63, %p64
      %p66 = scmp.ne.s32.totalorder %s54, %s55
      %p67 = scmp.eq.s32.totalorder %s24, 1
      %p68 = por %p66, %p67
      %p70 = scmp.ne.s32.totalorder %s55, %s69
      %p71 = scmp.eq.s32.totalorder %s24, 0
      %p72 = por %p70, %p71
      %s74 = sadd.s32 %s73, 1
      %p77 = scmp.eq.s32.totalorder %s18, 1
      %p78 = scmp.ne.s32.totalorder %s73, %s75
      %p79 = scmp.eq.s32.totalorder %s18, 0
      %p80 = por %p78, %p79
      %p81 = scmp.ne.s32.totalorder %s73, %s75
      %p82 = scmp.eq.s32.totalorder %s23, 1
      %p83 = por %p81, %p82
      %p84 = scmp.ne.s32.totalorder %s75, %s76
      %p85 = scmp.eq.s32.totalorder %s23, 0
      %p86 = por %p84, %p85
      %p87 = scmp.ne.s32.totalorder %s75, %s76
      %p88 = scmp.eq.s32.totalorder %s24, 1
      %p89 = por %p87, %p88
      %p91 = scmp.ne.s32.totalorder %s76, %s90
      %p92 = scmp.eq.s32.totalorder %s24, 0
      %p93 = por %p91, %p92
      %s95 = sadd.s32 %s94, 1
      %p98 = scmp.eq.s32.totalorder %s18, 1
      %p99 = scmp.ne.s32.totalorder %s94, %s96
      %p100 = scmp.eq.s32.totalorder %s18, 0
      %p101 = por %p99, %p100
      %p102 = scmp.ne.s32.totalorder %s94, %s96
      %p103 = scmp.eq.s32.totalorder %s23, 1
      %p104 = por %p102, %p103
      %p105 = scmp.ne.s32.totalorder %s96, %s97
      %p106 = scmp.eq.s32.totalorder %s23, 0
      %p107 = por %p105, %p106
      %p108 = scmp.ne.s32.totalorder %s96, %s97
      %p109 = scmp.eq.s32.totalorder %s24, 1
      %p110 = por %p108, %p109
      %p112 = scmp.ne.s32.totalorder %s97, %s111
      %p113 = scmp.eq.s32.totalorder %s24, 0
      %p114 = por %p112, %p113
      %s116 = sadd.s32 %s115, 1
      %p119 = scmp.eq.s32.totalorder %s18, 1
      %p120 = scmp.ne.s32.totalorder %s115, %s117
      %p121 = scmp.eq.s32.totalorder %s18, 0
      %p122 = por %p120, %p121
      %p123 = scmp.ne.s32.totalorder %s115, %s117
      %p124 = scmp.eq.s32.totalorder %s23, 1
      %p125 = por %p123, %p124
      %p126 = scmp.ne.s32.totalorder %s117, %s118
      %p127 = scmp.eq.s32.totalorder %s23, 0
      %p128 = por %p126, %p127
      %p129 = scmp.ne.s32.totalorder %s117, %s118
      %p130 = scmp.eq.s32.totalorder %s24, 1
      %p131 = por %p129, %p130
      %p133 = scmp.ne.s32.totalorder %s118, %s132
      %p134 = scmp.eq.s32.totalorder %s24, 0
      %p135 = por %p133, %p134
      %s137 = sadd.s32 %s136, 1
      %p140 = scmp.eq.s32.totalorder %s18, 1
      %p141 = scmp.ne.s32.totalorder %s136, %s138
      %p142 = scmp.eq.s32.totalorder %s18, 0
      %p143 = por %p141, %p142
      %p144 = scmp.ne.s32.totalorder %s136, %s138
      %p145 = scmp.eq.s32.totalorder %s23, 1
      %p146 = por %p144, %p145
      %p147 = scmp.ne.s32.totalorder %s138, %s139
      %p148 = scmp.eq.s32.totalorder %s23, 0
      %p149 = por %p147, %p148
      %p150 = scmp.ne.s32.totalorder %s138, %s139
      %p151 = scmp.eq.s32.totalorder %s24, 1
      %p152 = por %p150, %p151
      %p154 = scmp.ne.s32.totalorder %s139, %s153
      %p155 = scmp.eq.s32.totalorder %s24, 0
      %p156 = por %p154, %p155
      %s158 = sadd.s32 %s157, 1
      %p161 = scmp.eq.s32.totalorder %s18, 1
      %p162 = scmp.ne.s32.totalorder %s157, %s159
      %p163 = scmp.eq.s32.totalorder %s18, 0
      %p164 = por %p162, %p163
      %p165 = scmp.ne.s32.totalorder %s157, %s159
      %p166 = scmp.eq.s32.totalorder %s23, 1
      %p167 = por %p165, %p166
      %p168 = scmp.ne.s32.totalorder %s159, %s160
      %p169 = scmp.eq.s32.totalorder %s23, 0
      %p170 = por %p168, %p169
      %p171 = scmp.ne.s32.totalorder %s159, %s160
      %p172 = scmp.eq.s32.totalorder %s24, 1
      %p173 = por %p171, %p172
      %p175 = scmp.ne.s32.totalorder %s160, %s174
      %p176 = scmp.eq.s32.totalorder %s24, 0
      %p177 = por %p175, %p176
      %s178 = ssub.s32 %s18, %s25
      %p179 = scmp.eq.s32.totalorder %s178, 0
      %s181 = sadd.s32 %s180, 1
      %s182 = scalar_select %p179, %s180, %s181
      %p185 = pneg %p179
      %p186 = scmp.eq.s32.totalorder %s18, 1
      %p187 = por %p185, %p186
      %p188 = scmp.ne.s32.totalorder %s180, %s183
      %p189 = scmp.eq.s32.totalorder %s18, 0
      %p190 = por %p188, %p189
      %p191 = scmp.ne.s32.totalorder %s180, %s183
      %p192 = scmp.eq.s32.totalorder %s23, 1
      %p193 = por %p191, %p192
      %p194 = scmp.ne.s32.totalorder %s183, %s184
      %p195 = scmp.eq.s32.totalorder %s23, 0
      %p196 = por %p194, %p195
      %p197 = scmp.ne.s32.totalorder %s183, %s184
      %p198 = scmp.eq.s32.totalorder %s24, 1
      %p199 = por %p197, %p198
      %p201 = scmp.ne.s32.totalorder %s184, %s200
      %p202 = scmp.eq.s32.totalorder %s24, 0
      %p203 = por %p201, %p202
      %p204 = scmp.le.s32.totalorder 1, %s18
      %p205 = scmp.lt.s32.totalorder %s18, 3
      %p206 = pnand %p204, %p205
      %p207 = pneg %p206
      // Predicated region
      $region9: #{tpu_custom_call.1} parent=5 // pred_check
        _
      $region10: #{tpu_custom_call.1} parent=5 // pred_check_branch
        %209 = sbr.rel (%p206) target = $region12
      $region11: #{tpu_custom_call.1} parent=5 // pred_region
        %s210 = ssub.s32 %s18, 1
        // Predicated region
        $region13: #{tpu_custom_call.1} parent=11 // pred_check
          %p211 = pneg %p65
        $region14: #{tpu_custom_call.1} parent=11 // pred_check_branch
          %213 = sbr.rel (%p211) target = $region16
        $region15: #{tpu_custom_call.1} parent=11 // pred_region
          _
        $region16: #{tpu_custom_call.1} parent=11 // pred_fallthru
          _
        // Predicated region
        $region17: #{tpu_custom_call.1} parent=11 // pred_check
          %p214 = pneg %p86
        $region18: #{tpu_custom_call.1} parent=11 // pred_check_branch
          %216 = sbr.rel (%p214) target = $region20
        $region19: #{tpu_custom_call.1} parent=11 // pred_region
          _
        $region20: #{tpu_custom_call.1} parent=11 // pred_fallthru
          _
        // Predicated region
        $region21: #{tpu_custom_call.1} parent=11 // pred_check
          %p217 = pneg %p107
        $region22: #{tpu_custom_call.1} parent=11 // pred_check_branch
          %219 = sbr.rel (%p217) target = $region24
        $region23: #{tpu_custom_call.1} parent=11 // pred_region
          %221 = vsyncadd [#allocation6], 0
          %s222 = sshll.u32 %s3, 4
          %s223 = int_to_ptr.hbm [resolvable:$true] %s222
          %s224 = sshll.u32 [#allocation5], 4
          %s225 = int_to_ptr.vmem [resolvable:$true] %s224
          %230 = dma.hbm_to_vmem [thread:$0]  %s223, 4096, %s225, [#allocation6], 128, 128, 8
        $region24: #{tpu_custom_call.1} parent=11 // pred_fallthru
          _
        // Predicated region
        $region25: #{tpu_custom_call.1} parent=11 // pred_check
          %p231 = pneg %p128
        $region26: #{tpu_custom_call.1} parent=11 // pred_check_branch
          %233 = sbr.rel (%p231) target = $region28
        $region27: #{tpu_custom_call.1} parent=11 // pred_region
          _
        $region28: #{tpu_custom_call.1} parent=11 // pred_fallthru
          _
        // Predicated region
        $region29: #{tpu_custom_call.1} parent=11 // pred_check
          %p234 = pneg %p149
        $region30: #{tpu_custom_call.1} parent=11 // pred_check_branch
          %236 = sbr.rel (%p234) target = $region32
        $region31: #{tpu_custom_call.1} parent=11 // pred_region
          _
        $region32: #{tpu_custom_call.1} parent=11 // pred_fallthru
          _
        // Predicated region
        $region33: #{tpu_custom_call.1} parent=11 // pred_check
          %p237 = pneg %p170
        $region34: #{tpu_custom_call.1} parent=11 // pred_check_branch
          %239 = sbr.rel (%p237) target = $region36
        $region35: #{tpu_custom_call.1} parent=11 // pred_region
          _
        $region36: #{tpu_custom_call.1} parent=11 // pred_fallthru
          _
      $region12: #{tpu_custom_call.1} parent=5 // pred_fallthru
        _
      %p240 = scmp.lt.s32.totalorder %s18, 2
      // Predicated region
      $region37: #{tpu_custom_call.1} parent=5 // pred_check
        %p241 = pneg %p240
      $region38: #{tpu_custom_call.1} parent=5 // pred_check_branch
        %243 = sbr.rel (%p241) target = $region40
      $region39: #{tpu_custom_call.1} parent=5 // pred_region
        // Predicated region
        $region41: #{tpu_custom_call.1} parent=39 // pred_check
          %p244 = pneg %p38
        $region42: #{tpu_custom_call.1} parent=39 // pred_check_branch
          %246 = sbr.rel (%p244) target = $region44
        $region43: #{tpu_custom_call.1} parent=39 // pred_region
          %s247 = sand.u32 %s28, 1
          %s248 = scalar_lea.sflag [#allocation4], %s247
          %s249 = sand.u32 %s28, 1
          %s250 = smul.addr %s249, 16
          %s251 = scalar_lea.vmem [#allocation3], %s250
          %s252 = smul.u32 2, %s18
          %254 = vsyncadd %s248, 0
          %s255 = smul.addr %s252, 8
          %s256 = scalar_lea.hbm %s0, %s255
          %s257 = sshll.u32 %s256, 4
          %s258 = int_to_ptr.hbm [resolvable:$true] %s257
          %s259 = sshll.u32 %s251, 4
          %s260 = int_to_ptr.vmem [resolvable:$true] %s259
          %265 = dma.hbm_to_vmem [thread:$0]  %s258, 256, %s260, %s248, 128, 128, 8
        $region44: #{tpu_custom_call.1} parent=39 // pred_fallthru
          _
      $region40: #{tpu_custom_call.1} parent=5 // pred_fallthru
        _
      %p266 = scmp.le.s32.totalorder 1, %s18
      %p267 = scmp.lt.s32.totalorder %s18, 3
      %p268 = pnand %p266, %p267
      %p269 = pneg %p268
      // Predicated region
      $region45: #{tpu_custom_call.1} parent=5 // pred_check
        _
      $region46: #{tpu_custom_call.1} parent=5 // pred_check_branch
        %271 = sbr.rel (%p268) target = $region48
      $region47: #{tpu_custom_call.1} parent=5 // pred_region
        %s272 = ssub.s32 %s18, 1
        %s273 = sand.u32 %s31, 1
        %s274 = scalar_lea.sflag [#allocation4], %s273
        %s275 = sand.u32 %s31, 1
        %s276 = smul.addr %s275, 16
        %s277 = scalar_lea.vmem [#allocation3], %s276
        // Predicated region
        $region49: #{tpu_custom_call.1} parent=47 // pred_check
          %p278 = pneg %p44
        $region50: #{tpu_custom_call.1} parent=47 // pred_check_branch
          %280 = sbr.rel (%p278) target = $region52
        $region51: #{tpu_custom_call.1} parent=47 // pred_region
          %282 = dma.done %s274, 256
        $region52: #{tpu_custom_call.1} parent=47 // pred_fallthru
          _
        // Predicated region
        $region53: #{tpu_custom_call.1} parent=47 // pred_check
          %p283 = pneg %p107
        $region54: #{tpu_custom_call.1} parent=47 // pred_check_branch
          %285 = sbr.rel (%p283) target = $region56
        $region55: #{tpu_custom_call.1} parent=47 // pred_region
          %287 = dma.done [#allocation6], 4096
        $region56: #{tpu_custom_call.1} parent=47 // pred_fallthru
          _
        %s288 = sand.u32 %s31, 1
        %s289 = scalar_lea.sflag [#allocation4], %s288
        %s290 = sand.u32 %s31, 1
        %s291 = smul.addr %s290, 16
        %s292 = scalar_lea.vmem [#allocation3], %s291
        %p293 = pneg %p44
        %p294 = pneg %p41
        %p295 = pneg %p65
        %p296 = pneg %p62
        %p297 = pneg %p86
        %p298 = pneg %p83
        %p299 = pneg %p107
        %p300 = pneg %p104
        %p301 = pneg %p128
        %p302 = pneg %p125
        %p303 = pneg %p149
        %p304 = pneg %p146
        %p305 = pneg %p170
        %p306 = pneg %p167
        %p307 = pneg %p196
        %p308 = pneg %p193
        %s309 = smul.u32 2, %s23
        %p310 = scmp.lt.s32.totalorder %s309, 3
        %s311 = scalar_select %p310, %s309, 3
        %s312 = smul.addr %s311, 8
        %s313 = scalar_lea.vmem %s7, %s312
        %s314 = smul.u32 2, %s23
        %s315 = smul.u32 2, %s23
        %p316 = scmp.lt.s32.totalorder %s315, 3
        %s317 = scalar_select %p316, %s315, 3
        %s318 = smul.addr %s317, 8
        %s319 = scalar_lea.vmem %s7, %s318
        %s320 = smul.u32 2, %s23
        %v321 = vld [vmem:[%s277] sm:$0xff]
        %v322 = vld [vmem:[%s277 + $0x8] sm:$0xff]
        %v323 = vpack.c.bf16 %v322, %v321
        %v324 = vld [vmem:[%s1] sm:$0xff]
        %v325 = vld [vmem:[%s1 + $0x8] sm:$0xff]
        %v326 = vld [vmem:[%s1 + $0x10] sm:$0xff]
        %v327 = vld [vmem:[%s1 + $0x18] sm:$0xff]
        %v328 = vld [vmem:[%s1 + $0x20] sm:$0xff]
        %v329 = vld [vmem:[%s1 + $0x28] sm:$0xff]
        %v330 = vld [vmem:[%s1 + $0x30] sm:$0xff]
        %v331 = vld [vmem:[%s1 + $0x38] sm:$0xff]
        %v332 = vld [vmem:[%s1 + $0x40] sm:$0xff]
        %v333 = vld [vmem:[%s1 + $0x48] sm:$0xff]
        %v334 = vld [vmem:[%s1 + $0x50] sm:$0xff]
        %v335 = vld [vmem:[%s1 + $0x58] sm:$0xff]
        %v336 = vld [vmem:[%s1 + $0x60] sm:$0xff]
        %v337 = vld [vmem:[%s1 + $0x68] sm:$0xff]
        %v338 = vld [vmem:[%s1 + $0x70] sm:$0xff]
        %v339 = vld [vmem:[%s1 + $0x78] sm:$0xff]
        %v340 = vld [vmem:[%s2] sm:$0x3]
        %v342 = vperm.slane %v340, 0
        %v343 = vperm.slane %v340, 1
        %v362 = vunpack.c.l.b16 %v324
        %v363 = vunpack.c.h.b16 %v324
        %v364 = vunpack.c.l.b16 %v325
        %v365 = vunpack.c.h.b16 %v325
        %v366 = vunpack.c.l.b16 %v326
        %v367 = vunpack.c.h.b16 %v326
        %v368 = vunpack.c.l.b16 %v327
        %v369 = vunpack.c.h.b16 %v327
        %v370 = vunpack.c.l.b16 %v328
        %v371 = vunpack.c.h.b16 %v328
        %v372 = vunpack.c.l.b16 %v329
        %v373 = vunpack.c.h.b16 %v329
        %v374 = vunpack.c.l.b16 %v330
        %v375 = vunpack.c.h.b16 %v330
        %v376 = vunpack.c.l.b16 %v331
        %v377 = vunpack.c.h.b16 %v331
        %v378 = vunpack.c.l.b16 %v332
        %v379 = vunpack.c.h.b16 %v332
        %v380 = vunpack.c.l.b16 %v333
        %v381 = vunpack.c.h.b16 %v333
        %v382 = vunpack.c.l.b16 %v334
        %v383 = vunpack.c.h.b16 %v334
        %v384 = vunpack.c.l.b16 %v335
        %v385 = vunpack.c.h.b16 %v335
        %v386 = vunpack.c.l.b16 %v336
        %v387 = vunpack.c.h.b16 %v336
        %v388 = vunpack.c.l.b16 %v337
        %v389 = vunpack.c.h.b16 %v337
        %v390 = vunpack.c.l.b16 %v338
        %v391 = vunpack.c.h.b16 %v338
        %v392 = vunpack.c.l.b16 %v339
        %v393 = vunpack.c.h.b16 %v339
        %v394 = vpack.c.b16 %v364, %v362
        %v395 = vpack.c.b16 %v365, %v363
        %v396 = vpack.c.b16 %v368, %v366
        %v397 = vpack.c.b16 %v369, %v367
        %v398 = vpack.c.b16 %v372, %v370
        %v399 = vpack.c.b16 %v373, %v371
        %v400 = vpack.c.b16 %v376, %v374
        %v401 = vpack.c.b16 %v377, %v375
        %v402 = vpack.c.b16 %v380, %v378
        %v403 = vpack.c.b16 %v381, %v379
        %v404 = vpack.c.b16 %v384, %v382
        %v405 = vpack.c.b16 %v385, %v383
        %v406 = vpack.c.b16 %v388, %v386
        %v407 = vpack.c.b16 %v389, %v387
        %v408 = vpack.c.b16 %v392, %v390
        %v409 = vpack.c.b16 %v393, %v391
        %426 = vmatpush.bf16.msra.mxu0 %v408
        %427 = vmatpush.bf16.msra.mxu0 %v406
        %428 = vmatpush.bf16.msra.mxu0 %v404
        %429 = vmatpush.bf16.msra.mxu0 %v402
        %430 = vmatpush.bf16.msra.mxu0 %v400
        %431 = vmatpush.bf16.msra.mxu0 %v398
        %432 = vmatpush.bf16.msra.mxu0 %v396
        %433 = vmatpush.bf16.msra.mxu0 %v394
        %434 = vmatmul.bf16.gmra.mxu0 %v323
        %v435 = vpop.f32.mrf.mxu0
        %v436 = vadd.f32 %v342, %v435
        %v437 = vpop.f32.mrf.mxu0
        %v438 = vadd.f32 %v342, %v437
        %439 = vdwg.mxu0
        %440 = vmatpush.bf16.msra.mxu0 %v409
        %441 = vmatpush.bf16.msra.mxu0 %v407
        %442 = vmatpush.bf16.msra.mxu0 %v405
        %443 = vmatpush.bf16.msra.mxu0 %v403
        %444 = vmatpush.bf16.msra.mxu0 %v401
        %445 = vmatpush.bf16.msra.mxu0 %v399
        %446 = vmatpush.bf16.msra.mxu0 %v397
        %447 = vmatpush.bf16.msra.mxu0 %v395
        %448 = vmatmul.bf16.gmra.mxu0 %v323
        %v449 = vpop.f32.mrf.mxu0
        %v450 = vadd.f32 %v343, %v449
        %v451 = vpop.f32.mrf.mxu0
        %v452 = vadd.f32 %v343, %v451
        %453 = vdwg.mxu0
        %v454 = vmax.f32 %v436, 0.0
        %v455 = vmax.f32 %v450, 0.0
        %v456 = vmax.f32 %v438, 0.0
        %v457 = vmax.f32 %v452, 0.0
        %v458 = vpack.c.bf16 %v456, %v454
        %v459 = vpack.c.bf16 %v457, %v455
        %v460 = vld [vmem:[#allocation5] sm:$0xff]
        %v461 = vld [vmem:[#allocation5 + $0x8] sm:$0xff]
        %v462 = vld [vmem:[#allocation5 + $0x10] sm:$0xff]
        %v463 = vld [vmem:[#allocation5 + $0x18] sm:$0xff]
        %v464 = vld [vmem:[#allocation5 + $0x20] sm:$0xff]
        %v465 = vld [vmem:[#allocation5 + $0x28] sm:$0xff]
        %v466 = vld [vmem:[#allocation5 + $0x30] sm:$0xff]
        %v467 = vld [vmem:[#allocation5 + $0x38] sm:$0xff]
        %v468 = vld [vmem:[#allocation5 + $0x40] sm:$0xff]
        %v469 = vld [vmem:[#allocation5 + $0x48] sm:$0xff]
        %v470 = vld [vmem:[#allocation5 + $0x50] sm:$0xff]
        %v471 = vld [vmem:[#allocation5 + $0x58] sm:$0xff]
        %v472 = vld [vmem:[#allocation5 + $0x60] sm:$0xff]
        %v473 = vld [vmem:[#allocation5 + $0x68] sm:$0xff]
        %v474 = vld [vmem:[#allocation5 + $0x70] sm:$0xff]
        %v475 = vld [vmem:[#allocation5 + $0x78] sm:$0xff]
        %v476 = vld [vmem:[#allocation5 + $0x80] sm:$0xff]
        %v477 = vld [vmem:[#allocation5 + $0x88] sm:$0xff]
        %v478 = vld [vmem:[#allocation5 + $0x90] sm:$0xff]
        %v479 = vld [vmem:[#allocation5 + $0x98] sm:$0xff]
        %v480 = vld [vmem:[#allocation5 + $0xa0] sm:$0xff]
        %v481 = vld [vmem:[#allocation5 + $0xa8] sm:$0xff]
        %v482 = vld [vmem:[#allocation5 + $0xb0] sm:$0xff]
        %v483 = vld [vmem:[#allocation5 + $0xb8] sm:$0xff]
        %v484 = vld [vmem:[#allocation5 + $0xc0] sm:$0xff]
        %v485 = vld [vmem:[#allocation5 + $0xc8] sm:$0xff]
        %v486 = vld [vmem:[#allocation5 + $0xd0] sm:$0xff]
        %v487 = vld [vmem:[#allocation5 + $0xd8] sm:$0xff]
        %v488 = vld [vmem:[#allocation5 + $0xe0] sm:$0xff]
        %v489 = vld [vmem:[#allocation5 + $0xe8] sm:$0xff]
        %v490 = vld [vmem:[#allocation5 + $0xf0] sm:$0xff]
        %v491 = vld [vmem:[#allocation5 + $0xf8] sm:$0xff]
        %v492 = vld [vmem:[%s4] sm:$0x3]
        %v494 = vperm.slane %v492, 0
        %v495 = vperm.slane %v492, 1
        %v530 = vunpack.c.l.b16 %v460
        %v531 = vunpack.c.h.b16 %v460
        %v532 = vunpack.c.l.b16 %v461
        %v533 = vunpack.c.h.b16 %v461
        %v534 = vunpack.c.l.b16 %v462
        %v535 = vunpack.c.h.b16 %v462
        %v536 = vunpack.c.l.b16 %v463
        %v537 = vunpack.c.h.b16 %v463
        %v538 = vunpack.c.l.b16 %v464
        %v539 = vunpack.c.h.b16 %v464
        %v540 = vunpack.c.l.b16 %v465
        %v541 = vunpack.c.h.b16 %v465
        %v542 = vunpack.c.l.b16 %v466
        %v543 = vunpack.c.h.b16 %v466
        %v544 = vunpack.c.l.b16 %v467
        %v545 = vunpack.c.h.b16 %v467
        %v546 = vunpack.c.l.b16 %v468
        %v547 = vunpack.c.h.b16 %v468
        %v548 = vunpack.c.l.b16 %v469
        %v549 = vunpack.c.h.b16 %v469
        %v550 = vunpack.c.l.b16 %v470
        %v551 = vunpack.c.h.b16 %v470
        %v552 = vunpack.c.l.b16 %v471
        %v553 = vunpack.c.h.b16 %v471
        %v554 = vunpack.c.l.b16 %v472
        %v555 = vunpack.c.h.b16 %v472
        %v556 = vunpack.c.l.b16 %v473
        %v557 = vunpack.c.h.b16 %v473
        %v558 = vunpack.c.l.b16 %v474
        %v559 = vunpack.c.h.b16 %v474
        %v560 = vunpack.c.l.b16 %v475
        %v561 = vunpack.c.h.b16 %v475
        %v562 = vunpack.c.l.b16 %v476
        %v563 = vunpack.c.h.b16 %v476
        %v564 = vunpack.c.l.b16 %v477
        %v565 = vunpack.c.h.b16 %v477
        %v566 = vunpack.c.l.b16 %v478
        %v567 = vunpack.c.h.b16 %v478
        %v568 = vunpack.c.l.b16 %v479
        %v569 = vunpack.c.h.b16 %v479
        %v570 = vunpack.c.l.b16 %v480
        %v571 = vunpack.c.h.b16 %v480
        %v572 = vunpack.c.l.b16 %v481
        %v573 = vunpack.c.h.b16 %v481
        %v574 = vunpack.c.l.b16 %v482
        %v575 = vunpack.c.h.b16 %v482
        %v576 = vunpack.c.l.b16 %v483
        %v577 = vunpack.c.h.b16 %v483
        %v578 = vunpack.c.l.b16 %v484
        %v579 = vunpack.c.h.b16 %v484
        %v580 = vunpack.c.l.b16 %v485
        %v581 = vunpack.c.h.b16 %v485
        %v582 = vunpack.c.l.b16 %v486
        %v583 = vunpack.c.h.b16 %v486
        %v584 = vunpack.c.l.b16 %v487
        %v585 = vunpack.c.h.b16 %v487
        %v586 = vunpack.c.l.b16 %v488
        %v587 = vunpack.c.h.b16 %v488
        %v588 = vunpack.c.l.b16 %v489
        %v589 = vunpack.c.h.b16 %v489
        %v590 = vunpack.c.l.b16 %v490
        %v591 = vunpack.c.h.b16 %v490
        %v592 = vunpack.c.l.b16 %v491
        %v593 = vunpack.c.h.b16 %v491
        %v594 = vpack.c.b16 %v532, %v530
        %v595 = vpack.c.b16 %v533, %v531
        %v596 = vpack.c.b16 %v536, %v534
        %v597 = vpack.c.b16 %v537, %v535
        %v598 = vpack.c.b16 %v540, %v538
        %v599 = vpack.c.b16 %v541, %v539
        %v600 = vpack.c.b16 %v544, %v542
        %v601 = vpack.c.b16 %v545, %v543
        %v602 = vpack.c.b16 %v548, %v546
        %v603 = vpack.c.b16 %v549, %v547
        %v604 = vpack.c.b16 %v552, %v550
        %v605 = vpack.c.b16 %v553, %v551
        %v606 = vpack.c.b16 %v556, %v554
        %v607 = vpack.c.b16 %v557, %v555
        %v608 = vpack.c.b16 %v560, %v558
        %v609 = vpack.c.b16 %v561, %v559
        %v610 = vpack.c.b16 %v564, %v562
        %v611 = vpack.c.b16 %v565, %v563
        %v612 = vpack.c.b16 %v568, %v566
        %v613 = vpack.c.b16 %v569, %v567
        %v614 = vpack.c.b16 %v572, %v570
        %v615 = vpack.c.b16 %v573, %v571
        %v616 = vpack.c.b16 %v576, %v574
        %v617 = vpack.c.b16 %v577, %v575
        %v618 = vpack.c.b16 %v580, %v578
        %v619 = vpack.c.b16 %v581, %v579
        %v620 = vpack.c.b16 %v584, %v582
        %v621 = vpack.c.b16 %v585, %v583
        %v622 = vpack.c.b16 %v588, %v586
        %v623 = vpack.c.b16 %v589, %v587
        %v624 = vpack.c.b16 %v592, %v590
        %v625 = vpack.c.b16 %v593, %v591
        %658 = vmatpush.bf16.msra.mxu0 %v608
        %659 = vmatpush.bf16.msra.mxu0 %v606
        %660 = vmatpush.bf16.msra.mxu0 %v604
        %661 = vmatpush.bf16.msra.mxu0 %v602
        %662 = vmatpush.bf16.msra.mxu0 %v600
        %663 = vmatpush.bf16.msra.mxu0 %v598
        %664 = vmatpush.bf16.msra.mxu0 %v596
        %665 = vmatpush.bf16.msra.mxu0 %v594
        %666 = vmatmul.bf16.gmra.mxu0 %v458
        %v667 = vpop.f32.mrf.mxu0
        %v668 = vadd.f32 %v494, %v667
        %v669 = vpop.f32.mrf.mxu0
        %v670 = vadd.f32 %v494, %v669
        %671 = vdwg.mxu0
        %672 = vmatpush.bf16.msra.mxu0 %v624
        %673 = vmatpush.bf16.msra.mxu0 %v622
        %674 = vmatpush.bf16.msra.mxu0 %v620
        %675 = vmatpush.bf16.msra.mxu0 %v618
        %676 = vmatpush.bf16.msra.mxu0 %v616
        %677 = vmatpush.bf16.msra.mxu0 %v614
        %678 = vmatpush.bf16.msra.mxu0 %v612
        %679 = vmatpush.bf16.msra.mxu0 %v610
        %680 = vmatmul.bf16.gmra.mxu0 %v459
        %v681 = vpop.f32.mrf.mxu0
        %v682 = vadd.f32 %v668, %v681
        %v683 = vpop.f32.mrf.mxu0
        %v684 = vadd.f32 %v670, %v683
        %685 = vdwg.mxu0
        %686 = vmatpush.bf16.msra.mxu0 %v609
        %687 = vmatpush.bf16.msra.mxu0 %v607
        %688 = vmatpush.bf16.msra.mxu0 %v605
        %689 = vmatpush.bf16.msra.mxu0 %v603
        %690 = vmatpush.bf16.msra.mxu0 %v601
        %691 = vmatpush.bf16.msra.mxu0 %v599
        %692 = vmatpush.bf16.msra.mxu0 %v597
        %693 = vmatpush.bf16.msra.mxu0 %v595
        %694 = vmatmul.bf16.gmra.mxu0 %v458
        %v695 = vpop.f32.mrf.mxu0
        %v696 = vadd.f32 %v495, %v695
        %v697 = vpop.f32.mrf.mxu0
        %v698 = vadd.f32 %v495, %v697
        %699 = vdwg.mxu0
        %700 = vmatpush.bf16.msra.mxu0 %v625
        %701 = vmatpush.bf16.msra.mxu0 %v623
        %702 = vmatpush.bf16.msra.mxu0 %v621
        %703 = vmatpush.bf16.msra.mxu0 %v619
        %704 = vmatpush.bf16.msra.mxu0 %v617
        %705 = vmatpush.bf16.msra.mxu0 %v615
        %706 = vmatpush.bf16.msra.mxu0 %v613
        %707 = vmatpush.bf16.msra.mxu0 %v611
        %708 = vmatmul.bf16.gmra.mxu0 %v459
        %v709 = vpop.f32.mrf.mxu0
        %v710 = vadd.f32 %v696, %v709
        %v711 = vpop.f32.mrf.mxu0
        %v712 = vadd.f32 %v698, %v711
        %713 = vdwg.mxu0
        %v714 = vmax.f32 %v682, 0.0
        %v715 = vmax.f32 %v710, 0.0
        %v716 = vmax.f32 %v684, 0.0
        %v717 = vmax.f32 %v712, 0.0
        %v718 = vpack.c.bf16 %v716, %v714
        %v719 = vpack.c.bf16 %v717, %v715
        %v720 = vld [vmem:[%s5] sm:$0xf]
        %v721 = vld [vmem:[%s5 + $0x4] sm:$0xf]
        %v722 = vld [vmem:[%s5 + $0x8] sm:$0xf]
        %v723 = vld [vmem:[%s5 + $0xc] sm:$0xf]
        %v724 = vld [vmem:[%s5 + $0x10] sm:$0xf]
        %v725 = vld [vmem:[%s5 + $0x14] sm:$0xf]
        %v726 = vld [vmem:[%s5 + $0x18] sm:$0xf]
        %v727 = vld [vmem:[%s5 + $0x1c] sm:$0xf]
        %v728 = vld [vmem:[%s5 + $0x20] sm:$0xf]
        %v729 = vld [vmem:[%s5 + $0x24] sm:$0xf]
        %v730 = vld [vmem:[%s5 + $0x28] sm:$0xf]
        %v731 = vld [vmem:[%s5 + $0x2c] sm:$0xf]
        %v732 = vld [vmem:[%s5 + $0x30] sm:$0xf]
        %v733 = vld [vmem:[%s5 + $0x34] sm:$0xf]
        %v734 = vld [vmem:[%s5 + $0x38] sm:$0xf]
        %v735 = vld [vmem:[%s5 + $0x3c] sm:$0xf]
        %v736 = vld [vmem:[%s5 + $0x40] sm:$0xf]
        %v737 = vld [vmem:[%s5 + $0x44] sm:$0xf]
        %v738 = vld [vmem:[%s5 + $0x48] sm:$0xf]
        %v739 = vld [vmem:[%s5 + $0x4c] sm:$0xf]
        %v740 = vld [vmem:[%s5 + $0x50] sm:$0xf]
        %v741 = vld [vmem:[%s5 + $0x54] sm:$0xf]
        %v742 = vld [vmem:[%s5 + $0x58] sm:$0xf]
        %v743 = vld [vmem:[%s5 + $0x5c] sm:$0xf]
        %v744 = vld [vmem:[%s5 + $0x60] sm:$0xf]
        %v745 = vld [vmem:[%s5 + $0x64] sm:$0xf]
        %v746 = vld [vmem:[%s5 + $0x68] sm:$0xf]
        %v747 = vld [vmem:[%s5 + $0x6c] sm:$0xf]
        %v748 = vld [vmem:[%s5 + $0x70] sm:$0xf]
        %v749 = vld [vmem:[%s5 + $0x74] sm:$0xf]
        %v750 = vld [vmem:[%s5 + $0x78] sm:$0xf]
        %v751 = vld [vmem:[%s5 + $0x7c] sm:$0xf]
        %s752 = sld [smem:[#allocation2]]
        %v753 = vstv %s752
        %v786 = vunpack.c.l.b16 %v720
        %v787 = vunpack.c.l.b16 %v721
        %v788 = vunpack.c.l.b16 %v722
        %v789 = vunpack.c.l.b16 %v723
        %v790 = vunpack.c.l.b16 %v724
        %v791 = vunpack.c.l.b16 %v725
        %v792 = vunpack.c.l.b16 %v726
        %v793 = vunpack.c.l.b16 %v727
        %v794 = vunpack.c.l.b16 %v728
        %v795 = vunpack.c.l.b16 %v729
        %v796 = vunpack.c.l.b16 %v730
        %v797 = vunpack.c.l.b16 %v731
        %v798 = vunpack.c.l.b16 %v732
        %v799 = vunpack.c.l.b16 %v733
        %v800 = vunpack.c.l.b16 %v734
        %v801 = vunpack.c.l.b16 %v735
        %v802 = vunpack.c.l.b16 %v736
        %v803 = vunpack.c.l.b16 %v737
        %v804 = vunpack.c.l.b16 %v738
        %v805 = vunpack.c.l.b16 %v739
        %v806 = vunpack.c.l.b16 %v740
        %v807 = vunpack.c.l.b16 %v741
        %v808 = vunpack.c.l.b16 %v742
        %v809 = vunpack.c.l.b16 %v743
        %v810 = vunpack.c.l.b16 %v744
        %v811 = vunpack.c.l.b16 %v745
        %v812 = vunpack.c.l.b16 %v746
        %v813 = vunpack.c.l.b16 %v747
        %v814 = vunpack.c.l.b16 %v748
        %v815 = vunpack.c.l.b16 %v749
        %v816 = vunpack.c.l.b16 %v750
        %v817 = vunpack.c.l.b16 %v751
        %v818 = vpack.c.b16 %v787, %v786
        %v819 = vpack.c.b16 %v789, %v788
        %v820 = vpack.c.b16 %v791, %v790
        %v821 = vpack.c.b16 %v793, %v792
        %v822 = vpack.c.b16 %v795, %v794
        %v823 = vpack.c.b16 %v797, %v796
        %v824 = vpack.c.b16 %v799, %v798
        %v825 = vpack.c.b16 %v801, %v800
        %v826 = vpack.c.b16 %v803, %v802
        %v827 = vpack.c.b16 %v805, %v804
        %v828 = vpack.c.b16 %v807, %v806
        %v829 = vpack.c.b16 %v809, %v808
        %v830 = vpack.c.b16 %v811, %v810
        %v831 = vpack.c.b16 %v813, %v812
        %v832 = vpack.c.b16 %v815, %v814
        %v833 = vpack.c.b16 %v817, %v816
        %850 = vmatpush.bf16.msra.mxu0 %v825
        %851 = vmatpush.bf16.msra.mxu0 %v824
        %852 = vmatpush.bf16.msra.mxu0 %v823
        %853 = vmatpush.bf16.msra.mxu0 %v822
        %854 = vmatpush.bf16.msra.mxu0 %v821
        %855 = vmatpush.bf16.msra.mxu0 %v820
        %856 = vmatpush.bf16.msra.mxu0 %v819
        %857 = vmatpush.bf16.msra.mxu0 %v818
        %858 = vmatmul.bf16.gmra.mxu0 %v718
        %v859 = vpop.f32.mrf.mxu0
        %v860 = vadd.f32 %v753, %v859
        %v861 = vpop.f32.mrf.mxu0
        %v862 = vadd.f32 %v753, %v861
        %863 = vdwg.mxu0
        %864 = vmatpush.bf16.msra.mxu0 %v833
        %865 = vmatpush.bf16.msra.mxu0 %v832
        %866 = vmatpush.bf16.msra.mxu0 %v831
        %867 = vmatpush.bf16.msra.mxu0 %v830
        %868 = vmatpush.bf16.msra.mxu0 %v829
        %869 = vmatpush.bf16.msra.mxu0 %v828
        %870 = vmatpush.bf16.msra.mxu0 %v827
        %871 = vmatpush.bf16.msra.mxu0 %v826
        %872 = vmatmul.bf16.gmra.mxu0 %v719
        %v873 = vpop.f32.mrf.mxu0
        %v874 = vadd.f32 %v860, %v873
        %v875 = vpop.f32.mrf.mxu0
        %v876 = vadd.f32 %v862, %v875
        %877 = vdwg.mxu0
        %vm878 = vcmask 64512
        %879 = vst.msk [vmem:[%s319] sm:$0xff] %vm878, %v874
        %880 = vst.msk [vmem:[%s319 + $0x8] sm:$0xff] %vm878, %v876
        %s881 = smul.u32 2, %s23
        %p882 = scmp.lt.s32.totalorder %s881, 3
        %s883 = scalar_select %p882, %s881, 3
        %s884 = smul.addr %s883, 8
        %s885 = scalar_lea.vmem %s7, %s884
        // Predicated region
        $region57: #{tpu_custom_call.1} parent=47 // pred_check
          %p886 = pneg %p193
        $region58: #{tpu_custom_call.1} parent=47 // pred_check_branch
          %888 = sbr.rel (%p886) target = $region60
        $region59: #{tpu_custom_call.1} parent=47 // pred_region
          %s889 = smul.u32 2, %s23
        $region60: #{tpu_custom_call.1} parent=47 // pred_fallthru
          _
      $region48: #{tpu_custom_call.1} parent=5 // pred_fallthru
        _
      %p890 = scmp.le.s32.totalorder 2, %s18
      // Predicated region
      $region61: #{tpu_custom_call.1} parent=5 // pred_check
        %p891 = pneg %p890
      $region62: #{tpu_custom_call.1} parent=5 // pred_check_branch
        %893 = sbr.rel (%p891) target = $region64
      $region63: #{tpu_custom_call.1} parent=5 // pred_region
        %s894 = ssub.s32 %s18, 2
        // Predicated region
        $region65: #{tpu_custom_call.1} parent=63 // pred_check
          %p895 = pneg %p199
        $region66: #{tpu_custom_call.1} parent=63 // pred_check_branch
          %897 = sbr.rel (%p895) target = $region68
        $region67: #{tpu_custom_call.1} parent=63 // pred_region
          %s898 = smul.u32 2, %s24
          %p899 = scmp.lt.s32.totalorder %s898, 3
          %s900 = scalar_select %p899, %s898, 3
          %s901 = smul.addr %s900, 8
          %s902 = scalar_lea.vmem %s7, %s901
        $region68: #{tpu_custom_call.1} parent=63 // pred_fallthru
          _
      $region64: #{tpu_custom_call.1} parent=5 // pred_fallthru
        _
    $region6: #{tpu_custom_call.1} parent=1 // loop_footer
      %s22 = sadd.s32 1, %s18
    $region7: #{tpu_custom_call.1} parent=1 // loop_footer_branch
      %17 = sbr.rel target = $region3
    $region8: #{tpu_custom_call.1} parent=1 // loop_exit
      _
    %903 = vsyncpa [#allocation4], 1
    %s904 = scalar_lea.sflag [#allocation4], 1
    %905 = vsyncpa %s904, 1
    %906 = vsyncpa [#allocation6], 1

// kernel: tpu_custom_call.1
$region0: #{tpu_custom_call.1}
  #allocation0 [shape = 'u32[]', space=smem, size = 0x4, offset = 0x4, fixed_abs, tag = 'smem constant byte address 0x4 - core index']
  #allocation1 [shape = 'u32[72,128]{1,0:T(1,128)}', space=vmem, size = 0x9000, scoped, tag = 'internal scratch']
  #allocation2 [shape = 'f32[1]{0:T(128)S(6)}', space=smem, size = 0x200, scoped, tag = 'scoped memory for tpu_custom_call.1']
  %s0 = inlined_call_operand.hbm [shape: f32[32,128], index: 0, kind: input, shape index: {}]
  %s1 = inlined_call_operand.vmem [shape: bf16[128,256], index: 1, kind: input, shape index: {}]
  %s2 = inlined_call_operand.vmem [shape: f32[1,256], index: 2, kind: input, shape index: {}]
  %s3 = inlined_call_operand.hbm [shape: bf16[256,256], index: 3, kind: input, shape index: {}]
  %s4 = inlined_call_operand.vmem [shape: f32[1,256], index: 4, kind: input, shape index: {}]
  %s5 = inlined_call_operand.vmem [shape: bf16[256,8], index: 5, kind: input, shape index: {}]
  %s6 = inlined_call_operand.<no memory space> [shape: f32[1], index: 6, kind: input, shape index: {}]
  %s7 = inlined_call_operand.vmem [shape: f32[32,8], index: 7, kind: output, shape index: {}]
  %s8 = sld [smem:[#allocation0]]
  $region69: #{tpu_custom_call.1} parent=0
    _
  %s10 = ssub.s32 1, %s8
  %s11 = scalar_select 0, %s10, %s8
  %12 = sst [smem:[#allocation2]] %s6
  $region1: #{tpu_custom_call.1} parent=0
    #allocation3 [shape = 'u8[16384]{0}', space=vmem, size = 0x4000, scoped, tag = 'input window, operand 0']
    #allocation4 [shape = 's32[2]{0}', space=sflag, size = 0x8, scoped, tag = 'scoped memory for tpu_custom_call.1']
    #allocation5 [shape = 'u8[131072]{0}', space=vmem, size = 0x20000, scoped, tag = 'input window, operand 3, single buffered']
    #allocation6 [shape = 's32[1]{0}', space=sflag, size = 0x4, scoped, tag = 'scoped memory for tpu_custom_call.1']
    %13 = vsyncpa [#allocation4], 0
    %s14 = scalar_lea.sflag [#allocation4], 1
    %15 = vsyncpa %s14, 0
    %16 = vsyncpa [#allocation6], 0
    loop: start=0, step=1, limit=4
    $region2: #{tpu_custom_call.1} parent=1 // loop_pre_header
      _
    $region3: #{tpu_custom_call.1} parent=1 // loop_header
      %s18 = sphi 0, %s22
      %p19 = scmp.ge.s32.totalorder %s18, 4
      %s28 = sphi 0, %s30
      %s31 = sphi 0, %s28
      %s32 = sphi 0, %s31
      %s48 = sphi 0, %s32
      %s52 = sphi 0, %s52
      %s54 = sphi 0, %s52
      %s55 = sphi 0, %s54
      %s69 = sphi 0, %s55
      %s73 = sphi 0, %s73
      %s75 = sphi 0, %s73
      %s76 = sphi 0, %s75
      %s90 = sphi 0, %s76
      %s94 = sphi 0, %s94
      %s96 = sphi 0, %s94
      %s97 = sphi 0, %s96
      %s111 = sphi 0, %s97
      %s115 = sphi 0, %s115
      %s117 = sphi 0, %s115
      %s118 = sphi 0, %s117
      %s132 = sphi 0, %s118
      %s136 = sphi 0, %s136
      %s138 = sphi 0, %s136
      %s139 = sphi 0, %s138
      %s153 = sphi 0, %s139
      %s157 = sphi 0, %s157
      %s159 = sphi 0, %s157
      %s160 = sphi 0, %s159
      %s174 = sphi 0, %s160
      %s180 = sphi 0, %s182
      %s183 = sphi 0, %s180
      %s184 = sphi 0, %s183
      %s200 = sphi 0, %s184
    $region4: #{tpu_custom_call.1} parent=1 // loop_header_branch
      %21 = sbr.rel (%p19) target = $region8
    $region5: #{tpu_custom_call.1} parent=1 // loop_body
      %s23 = ssub.s32 %s18, 1
      %s24 = ssub.s32 %s18, 2
      %s25 = sadd.s32 %s18, 1
      %s26 = ssub.s32 %s18, %s25
      %p27 = scmp.eq.s32.totalorder %s26, 0
      %s29 = sadd.s32 %s28, 1
      %s30 = scalar_select %p27, %s28, %s29
      %p33 = pneg %p27
      %p34 = scmp.eq.s32.totalorder %s18, 1
      %p35 = por %p33, %p34
      %p36 = scmp.ne.s32.totalorder %s28, %s31
      %p37 = scmp.eq.s32.totalorder %s18, 0
      %p38 = por %p36, %p37
      %p39 = scmp.ne.s32.totalorder %s28, %s31
      %p40 = scmp.eq.s32.totalorder %s23, 1
      %p41 = por %p39, %p40
      %p42 = scmp.ne.s32.totalorder %s31, %s32
      %p43 = scmp.eq.s32.totalorder %s23, 0
      %p44 = por %p42, %p43
      %p45 = scmp.ne.s32.totalorder %s31, %s32
      %p46 = scmp.eq.s32.totalorder %s24, 1
      %p47 = por %p45, %p46
      %p49 = scmp.ne.s32.totalorder %s32, %s48
      %p50 = scmp.eq.s32.totalorder %s24, 0
      %p51 = por %p49, %p50
      %s53 = sadd.s32 %s52, 1
      %p56 = scmp.eq.s32.totalorder %s18, 1
      %p57 = scmp.ne.s32.totalorder %s52, %s54
      %p58 = scmp.eq.s32.totalorder %s18, 0
      %p59 = por %p57, %p58
      %p60 = scmp.ne.s32.totalorder %s52, %s54
      %p61 = scmp.eq.s32.totalorder %s23, 1
      %p62 = por %p60, %p61
      %p63 = scmp.ne.s32.totalorder %s54, %s55
      %p64 = scmp.eq.s32.totalorder %s23, 0
      %p65 = por %p63, %p64
      %p66 = scmp.ne.s32.totalorder %s54, %s55
      %p67 = scmp.eq.s32.totalorder %s24, 1
      %p68 = por %p66, %p67
      %p70 = scmp.ne.s32.totalorder %s55, %s69
      %p71 = scmp.eq.s32.totalorder %s24, 0
      %p72 = por %p70, %p71
      %s74 = sadd.s32 %s73, 1
      %p77 = scmp.eq.s32.totalorder %s18, 1
      %p78 = scmp.ne.s32.totalorder %s73, %s75
      %p79 = scmp.eq.s32.totalorder %s18, 0
      %p80 = por %p78, %p79
      %p81 = scmp.ne.s32.totalorder %s73, %s75
      %p82 = scmp.eq.s32.totalorder %s23, 1
      %p83 = por %p81, %p82
      %p84 = scmp.ne.s32.totalorder %s75, %s76
      %p85 = scmp.eq.s32.totalorder %s23, 0
      %p86 = por %p84, %p85
      %p87 = scmp.ne.s32.totalorder %s75, %s76
      %p88 = scmp.eq.s32.totalorder %s24, 1
      %p89 = por %p87, %p88
      %p91 = scmp.ne.s32.totalorder %s76, %s90
      %p92 = scmp.eq.s32.totalorder %s24, 0
      %p93 = por %p91, %p92
      %s95 = sadd.s32 %s94, 1
      %p98 = scmp.eq.s32.totalorder %s18, 1
      %p99 = scmp.ne.s32.totalorder %s94, %s96
      %p100 = scmp.eq.s32.totalorder %s18, 0
      %p101 = por %p99, %p100
      %p102 = scmp.ne.s32.totalorder %s94, %s96
      %p103 = scmp.eq.s32.totalorder %s23, 1
      %p104 = por %p102, %p103
      %p105 = scmp.ne.s32.totalorder %s96, %s97
      %p106 = scmp.eq.s32.totalorder %s23, 0
      %p107 = por %p105, %p106
      %p108 = scmp.ne.s32.totalorder %s96, %s97
      %p109 = scmp.eq.s32.totalorder %s24, 1
      %p110 = por %p108, %p109
      %p112 = scmp.ne.s32.totalorder %s97, %s111
      %p113 = scmp.eq.s32.totalorder %s24, 0
      %p114 = por %p112, %p113
      %s116 = sadd.s32 %s115, 1
      %p119 = scmp.eq.s32.totalorder %s18, 1
      %p120 = scmp.ne.s32.totalorder %s115, %s117
      %p121 = scmp.eq.s32.totalorder %s18, 0
      %p122 = por %p120, %p121
      %p123 = scmp.ne.s32.totalorder %s115, %s117
      %p124 = scmp.eq.s32.totalorder %s23, 1
      %p125 = por %p123, %p124
      %p126 = scmp.ne.s32.totalorder %s117, %s118
      %p127 = scmp.eq.s32.totalorder %s23, 0
      %p128 = por %p126, %p127
      %p129 = scmp.ne.s32.totalorder %s117, %s118
      %p130 = scmp.eq.s32.totalorder %s24, 1
      %p131 = por %p129, %p130
      %p133 = scmp.ne.s32.totalorder %s118, %s132
      %p134 = scmp.eq.s32.totalorder %s24, 0
      %p135 = por %p133, %p134
      %s137 = sadd.s32 %s136, 1
      %p140 = scmp.eq.s32.totalorder %s18, 1
      %p141 = scmp.ne.s32.totalorder %s136, %s138
      %p142 = scmp.eq.s32.totalorder %s18, 0
      %p143 = por %p141, %p142
      %p144 = scmp.ne.s32.totalorder %s136, %s138
      %p145 = scmp.eq.s32.totalorder %s23, 1
      %p146 = por %p144, %p145
      %p147 = scmp.ne.s32.totalorder %s138, %s139
      %p148 = scmp.eq.s32.totalorder %s23, 0
      %p149 = por %p147, %p148
      %p150 = scmp.ne.s32.totalorder %s138, %s139
      %p151 = scmp.eq.s32.totalorder %s24, 1
      %p152 = por %p150, %p151
      %p154 = scmp.ne.s32.totalorder %s139, %s153
      %p155 = scmp.eq.s32.totalorder %s24, 0
      %p156 = por %p154, %p155
      %s158 = sadd.s32 %s157, 1
      %p161 = scmp.eq.s32.totalorder %s18, 1
      %p162 = scmp.ne.s32.totalorder %s157, %s159
      %p163 = scmp.eq.s32.totalorder %s18, 0
      %p164 = por %p162, %p163
      %p165 = scmp.ne.s32.totalorder %s157, %s159
      %p166 = scmp.eq.s32.totalorder %s23, 1
      %p167 = por %p165, %p166
      %p168 = scmp.ne.s32.totalorder %s159, %s160
      %p169 = scmp.eq.s32.totalorder %s23, 0
      %p170 = por %p168, %p169
      %p171 = scmp.ne.s32.totalorder %s159, %s160
      %p172 = scmp.eq.s32.totalorder %s24, 1
      %p173 = por %p171, %p172
      %p175 = scmp.ne.s32.totalorder %s160, %s174
      %p176 = scmp.eq.s32.totalorder %s24, 0
      %p177 = por %p175, %p176
      %s178 = ssub.s32 %s18, %s25
      %p179 = scmp.eq.s32.totalorder %s178, 0
      %s181 = sadd.s32 %s180, 1
      %s182 = scalar_select %p179, %s180, %s181
      %p185 = pneg %p179
      %p186 = scmp.eq.s32.totalorder %s18, 1
      %p187 = por %p185, %p186
      %p188 = scmp.ne.s32.totalorder %s180, %s183
      %p189 = scmp.eq.s32.totalorder %s18, 0
      %p190 = por %p188, %p189
      %p191 = scmp.ne.s32.totalorder %s180, %s183
      %p192 = scmp.eq.s32.totalorder %s23, 1
      %p193 = por %p191, %p192
      %p194 = scmp.ne.s32.totalorder %s183, %s184
      %p195 = scmp.eq.s32.totalorder %s23, 0
      %p196 = por %p194, %p195
      %p197 = scmp.ne.s32.totalorder %s183, %s184
      %p198 = scmp.eq.s32.totalorder %s24, 1
      %p199 = por %p197, %p198
      %p201 = scmp.ne.s32.totalorder %s184, %s200
      %p202 = scmp.eq.s32.totalorder %s24, 0
      %p203 = por %p201, %p202
      %p204 = scmp.le.s32.totalorder 1, %s18
      %p205 = scmp.lt.s32.totalorder %s18, 3
      %p206 = pnand %p204, %p205
      %p207 = pneg %p206
      // Predicated region
      $region9: #{tpu_custom_call.1} parent=5 // pred_check
        _
      $region10: #{tpu_custom_call.1} parent=5 // pred_check_branch
        %209 = sbr.rel (%p206) target = $region12
      $region11: #{tpu_custom_call.1} parent=5 // pred_region
        %s210 = ssub.s32 %s18, 1
        // Predicated region
        $region13: #{tpu_custom_call.1} parent=11 // pred_check
          %p211 = pneg %p65
        $region14: #{tpu_custom_call.1} parent=11 // pred_check_branch
          %213 = sbr.rel (%p211) target = $region16
        $region15: #{tpu_custom_call.1} parent=11 // pred_region
          _
        $region16: #{tpu_custom_call.1} parent=11 // pred_fallthru
          _
        // Predicated region
        $region17: #{tpu_custom_call.1} parent=11 // pred_check
          %p214 = pneg %p86
        $region18: #{tpu_custom_call.1} parent=11 // pred_check_branch
          %216 = sbr.rel (%p214) target = $region20
        $region19: #{tpu_custom_call.1} parent=11 // pred_region
          _
        $region20: #{tpu_custom_call.1} parent=11 // pred_fallthru
          _
        // Predicated region
        $region21: #{tpu_custom_call.1} parent=11 // pred_check
          %p217 = pneg %p107
        $region22: #{tpu_custom_call.1} parent=11 // pred_check_branch
          %219 = sbr.rel (%p217) target = $region24
        $region23: #{tpu_custom_call.1} parent=11 // pred_region
          %221 = vsyncadd [#allocation6], 0
          %s222 = sshll.u32 %s3, 4
          %s223 = int_to_ptr.hbm [resolvable:$true] %s222
          %s224 = sshll.u32 [#allocation5], 4
          %s225 = int_to_ptr.vmem [resolvable:$true] %s224
          %230 = dma.hbm_to_vmem [thread:$0]  %s223, 4096, %s225, [#allocation6], 128, 128, 8
        $region24: #{tpu_custom_call.1} parent=11 // pred_fallthru
          _
        // Predicated region
        $region25: #{tpu_custom_call.1} parent=11 // pred_check
          %p231 = pneg %p128
        $region26: #{tpu_custom_call.1} parent=11 // pred_check_branch
          %233 = sbr.rel (%p231) target = $region28
        $region27: #{tpu_custom_call.1} parent=11 // pred_region
          _
        $region28: #{tpu_custom_call.1} parent=11 // pred_fallthru
          _
        // Predicated region
        $region29: #{tpu_custom_call.1} parent=11 // pred_check
          %p234 = pneg %p149
        $region30: #{tpu_custom_call.1} parent=11 // pred_check_branch
          %236 = sbr.rel (%p234) target = $region32
        $region31: #{tpu_custom_call.1} parent=11 // pred_region
          _
        $region32: #{tpu_custom_call.1} parent=11 // pred_fallthru
          _
        // Predicated region
        $region33: #{tpu_custom_call.1} parent=11 // pred_check
          %p237 = pneg %p170
        $region34: #{tpu_custom_call.1} parent=11 // pred_check_branch
          %239 = sbr.rel (%p237) target = $region36
        $region35: #{tpu_custom_call.1} parent=11 // pred_region
          _
        $region36: #{tpu_custom_call.1} parent=11 // pred_fallthru
          _
      $region12: #{tpu_custom_call.1} parent=5 // pred_fallthru
        _
      %p240 = scmp.lt.s32.totalorder %s18, 2
      // Predicated region
      $region37: #{tpu_custom_call.1} parent=5 // pred_check
        %p241 = pneg %p240
      $region38: #{tpu_custom_call.1} parent=5 // pred_check_branch
        %243 = sbr.rel (%p241) target = $region40
      $region39: #{tpu_custom_call.1} parent=5 // pred_region
        // Predicated region
        $region41: #{tpu_custom_call.1} parent=39 // pred_check
          %p244 = pneg %p38
        $region42: #{tpu_custom_call.1} parent=39 // pred_check_branch
          %246 = sbr.rel (%p244) target = $region44
        $region43: #{tpu_custom_call.1} parent=39 // pred_region
          %s247 = sand.u32 %s28, 1
          %s248 = scalar_lea.sflag [#allocation4], %s247
          %s249 = sand.u32 %s28, 1
          %s250 = smul.addr %s249, 16
          %s251 = scalar_lea.vmem [#allocation3], %s250
          %s252 = smul.u32 2, %s18
          %254 = vsyncadd %s248, 0
          %s255 = smul.addr %s252, 8
          %s256 = scalar_lea.hbm %s0, %s255
          %s257 = sshll.u32 %s256, 4
          %s258 = int_to_ptr.hbm [resolvable:$true] %s257
          %s259 = sshll.u32 %s251, 4
          %s260 = int_to_ptr.vmem [resolvable:$true] %s259
          %265 = dma.hbm_to_vmem [thread:$0]  %s258, 256, %s260, %s248, 128, 128, 8
        $region44: #{tpu_custom_call.1} parent=39 // pred_fallthru
          _
      $region40: #{tpu_custom_call.1} parent=5 // pred_fallthru
        _
      %p266 = scmp.le.s32.totalorder 1, %s18
      %p267 = scmp.lt.s32.totalorder %s18, 3
      %p268 = pnand %p266, %p267
      %p269 = pneg %p268
      // Predicated region
      $region45: #{tpu_custom_call.1} parent=5 // pred_check
        _
      $region46: #{tpu_custom_call.1} parent=5 // pred_check_branch
        %271 = sbr.rel (%p268) target = $region48
      $region47: #{tpu_custom_call.1} parent=5 // pred_region
        %s272 = ssub.s32 %s18, 1
        %s273 = sand.u32 %s31, 1
        %s274 = scalar_lea.sflag [#allocation4], %s273
        %s275 = sand.u32 %s31, 1
        %s276 = smul.addr %s275, 16
        %s277 = scalar_lea.vmem [#allocation3], %s276
        // Predicated region
        $region49: #{tpu_custom_call.1} parent=47 // pred_check
          %p278 = pneg %p44
        $region50: #{tpu_custom_call.1} parent=47 // pred_check_branch
          %280 = sbr.rel (%p278) target = $region52
        $region51: #{tpu_custom_call.1} parent=47 // pred_region
          %282 = dma.done %s274, 256
        $region52: #{tpu_custom_call.1} parent=47 // pred_fallthru
          _
        // Predicated region
        $region53: #{tpu_custom_call.1} parent=47 // pred_check
          %p283 = pneg %p107
        $region54: #{tpu_custom_call.1} parent=47 // pred_check_branch
          %285 = sbr.rel (%p283) target = $region56
        $region55: #{tpu_custom_call.1} parent=47 // pred_region
          %287 = dma.done [#allocation6], 4096
        $region56: #{tpu_custom_call.1} parent=47 // pred_fallthru
          _
        %s288 = sand.u32 %s31, 1
        %s289 = scalar_lea.sflag [#allocation4], %s288
        %s290 = sand.u32 %s31, 1
        %s291 = smul.addr %s290, 16
        %s292 = scalar_lea.vmem [#allocation3], %s291
        %p293 = pneg %p44
        %p294 = pneg %p41
        %p295 = pneg %p65
        %p296 = pneg %p62
        %p297 = pneg %p86
        %p298 = pneg %p83
        %p299 = pneg %p107
        %p300 = pneg %p104
        %p301 = pneg %p128
        %p302 = pneg %p125
        %p303 = pneg %p149
        %p304 = pneg %p146
        %p305 = pneg %p170
        %p306 = pneg %p167
        %p307 = pneg %p196
        %p308 = pneg %p193
        %s309 = smul.u32 2, %s23
        %p310 = scmp.lt.s32.totalorder %s309, 3
        %s311 = scalar_select %p310, %s309, 3
        %s312 = smul.addr %s311, 8
        %s313 = scalar_lea.vmem %s7, %s312
        %s314 = smul.u32 2, %s23
        %s315 = smul.u32 2, %s23
        %p316 = scmp.lt.s32.totalorder %s315, 3
        %s317 = scalar_select %p316, %s315, 3
        %s318 = smul.addr %s317, 8
        %s319 = scalar_lea.vmem %s7, %s318
        %s320 = smul.u32 2, %s23
        %v321 = vld [vmem:[%s277] sm:$0xff]
        %v322 = vld [vmem:[%s277 + $0x8] sm:$0xff]
        %v323 = vpack.c.bf16 %v322, %v321
        %v324 = vld [vmem:[%s1] sm:$0xff]
        %v325 = vld [vmem:[%s1 + $0x8] sm:$0xff]
        %v326 = vld [vmem:[%s1 + $0x10] sm:$0xff]
        %v327 = vld [vmem:[%s1 + $0x18] sm:$0xff]
        %v328 = vld [vmem:[%s1 + $0x20] sm:$0xff]
        %v329 = vld [vmem:[%s1 + $0x28] sm:$0xff]
        %v330 = vld [vmem:[%s1 + $0x30] sm:$0xff]
        %v331 = vld [vmem:[%s1 + $0x38] sm:$0xff]
        %v332 = vld [vmem:[%s1 + $0x40] sm:$0xff]
        %v333 = vld [vmem:[%s1 + $0x48] sm:$0xff]
        %v334 = vld [vmem:[%s1 + $0x50] sm:$0xff]
        %v335 = vld [vmem:[%s1 + $0x58] sm:$0xff]
        %v336 = vld [vmem:[%s1 + $0x60] sm:$0xff]
        %v337 = vld [vmem:[%s1 + $0x68] sm:$0xff]
        %v338 = vld [vmem:[%s1 + $0x70] sm:$0xff]
        %v339 = vld [vmem:[%s1 + $0x78] sm:$0xff]
        %v340 = vld [vmem:[%s2] sm:$0x3]
        %v342 = vperm.slane %v340, 0
        %v343 = vperm.slane %v340, 1
        %v362 = vunpack.c.l.b16 %v324
        %v363 = vunpack.c.h.b16 %v324
        %v364 = vunpack.c.l.b16 %v325
        %v365 = vunpack.c.h.b16 %v325
        %v366 = vunpack.c.l.b16 %v326
        %v367 = vunpack.c.h.b16 %v326
        %v368 = vunpack.c.l.b16 %v327
        %v369 = vunpack.c.h.b16 %v327
        %v370 = vunpack.c.l.b16 %v328
        %v371 = vunpack.c.h.b16 %v328
        %v372 = vunpack.c.l.b16 %v329
        %v373 = vunpack.c.h.b16 %v329
        %v374 = vunpack.c.l.b16 %v330
        %v375 = vunpack.c.h.b16 %v330
        %v376 = vunpack.c.l.b16 %v331
        %v377 = vunpack.c.h.b16 %v331
        %v378 = vunpack.c.l.b16 %v332
        %v379 = vunpack.c.h.b16 %v332
        %v380 = vunpack.c.l.b16 %v333
        %v381 = vunpack.c.h.b16 %v333
        %v382 = vunpack.c.l.b16 %v334
        %v383 = vunpack.c.h.b16 %v334
        %v384 = vunpack.c.l.b16 %v335
        %v385 = vunpack.c.h.b16 %v335
        %v386 = vunpack.c.l.b16 %v336
        %v387 = vunpack.c.h.b16 %v336
        %v388 = vunpack.c.l.b16 %v337
        %v389 = vunpack.c.h.b16 %v337
        %v390 = vunpack.c.l.b16 %v338
        %v391 = vunpack.c.h.b16 %v338
        %v392 = vunpack.c.l.b16 %v339
        %v393 = vunpack.c.h.b16 %v339
        %v394 = vpack.c.b16 %v364, %v362
        %v395 = vpack.c.b16 %v365, %v363
        %v396 = vpack.c.b16 %v368, %v366
        %v397 = vpack.c.b16 %v369, %v367
        %v398 = vpack.c.b16 %v372, %v370
        %v399 = vpack.c.b16 %v373, %v371
        %v400 = vpack.c.b16 %v376, %v374
        %v401 = vpack.c.b16 %v377, %v375
        %v402 = vpack.c.b16 %v380, %v378
        %v403 = vpack.c.b16 %v381, %v379
        %v404 = vpack.c.b16 %v384, %v382
        %v405 = vpack.c.b16 %v385, %v383
        %v406 = vpack.c.b16 %v388, %v386
        %v407 = vpack.c.b16 %v389, %v387
        %v408 = vpack.c.b16 %v392, %v390
        %v409 = vpack.c.b16 %v393, %v391
        %426 = vmatpush.bf16.msra.mxu0 %v408
        %427 = vmatpush.bf16.msra.mxu0 %v406
        %428 = vmatpush.bf16.msra.mxu0 %v404
        %429 = vmatpush.bf16.msra.mxu0 %v402
        %430 = vmatpush.bf16.msra.mxu0 %v400
        %431 = vmatpush.bf16.msra.mxu0 %v398
        %432 = vmatpush.bf16.msra.mxu0 %v396
        %433 = vmatpush.bf16.msra.mxu0 %v394
        %434 = vmatmul.bf16.gmra.mxu0 %v323
        %v435 = vpop.f32.mrf.mxu0
        %v436 = vadd.f32 %v342, %v435
        %v437 = vpop.f32.mrf.mxu0
        %v438 = vadd.f32 %v342, %v437
        %439 = vdwg.mxu0
        %440 = vmatpush.bf16.msra.mxu0 %v409
        %441 = vmatpush.bf16.msra.mxu0 %v407
        %442 = vmatpush.bf16.msra.mxu0 %v405
        %443 = vmatpush.bf16.msra.mxu0 %v403
        %444 = vmatpush.bf16.msra.mxu0 %v401
        %445 = vmatpush.bf16.msra.mxu0 %v399
        %446 = vmatpush.bf16.msra.mxu0 %v397
        %447 = vmatpush.bf16.msra.mxu0 %v395
        %448 = vmatmul.bf16.gmra.mxu0 %v323
        %v449 = vpop.f32.mrf.mxu0
        %v450 = vadd.f32 %v343, %v449
        %v451 = vpop.f32.mrf.mxu0
        %v452 = vadd.f32 %v343, %v451
        %453 = vdwg.mxu0
        %v454 = vmax.f32 %v436, 0.0
        %v455 = vmax.f32 %v450, 0.0
        %v456 = vmax.f32 %v438, 0.0
        %v457 = vmax.f32 %v452, 0.0
        %v458 = vpack.c.bf16 %v456, %v454
        %v459 = vpack.c.bf16 %v457, %v455
        %v460 = vld [vmem:[#allocation5] sm:$0xff]
        %v461 = vld [vmem:[#allocation5 + $0x8] sm:$0xff]
        %v462 = vld [vmem:[#allocation5 + $0x10] sm:$0xff]
        %v463 = vld [vmem:[#allocation5 + $0x18] sm:$0xff]
        %v464 = vld [vmem:[#allocation5 + $0x20] sm:$0xff]
        %v465 = vld [vmem:[#allocation5 + $0x28] sm:$0xff]
        %v466 = vld [vmem:[#allocation5 + $0x30] sm:$0xff]
        %v467 = vld [vmem:[#allocation5 + $0x38] sm:$0xff]
        %v468 = vld [vmem:[#allocation5 + $0x40] sm:$0xff]
        %v469 = vld [vmem:[#allocation5 + $0x48] sm:$0xff]
        %v470 = vld [vmem:[#allocation5 + $0x50] sm:$0xff]
        %v471 = vld [vmem:[#allocation5 + $0x58] sm:$0xff]
        %v472 = vld [vmem:[#allocation5 + $0x60] sm:$0xff]
        %v473 = vld [vmem:[#allocation5 + $0x68] sm:$0xff]
        %v474 = vld [vmem:[#allocation5 + $0x70] sm:$0xff]
        %v475 = vld [vmem:[#allocation5 + $0x78] sm:$0xff]
        %v476 = vld [vmem:[#allocation5 + $0x80] sm:$0xff]
        %v477 = vld [vmem:[#allocation5 + $0x88] sm:$0xff]
        %v478 = vld [vmem:[#allocation5 + $0x90] sm:$0xff]
        %v479 = vld [vmem:[#allocation5 + $0x98] sm:$0xff]
        %v480 = vld [vmem:[#allocation5 + $0xa0] sm:$0xff]
        %v481 = vld [vmem:[#allocation5 + $0xa8] sm:$0xff]
        %v482 = vld [vmem:[#allocation5 + $0xb0] sm:$0xff]
        %v483 = vld [vmem:[#allocation5 + $0xb8] sm:$0xff]
        %v484 = vld [vmem:[#allocation5 + $0xc0] sm:$0xff]
        %v485 = vld [vmem:[#allocation5 + $0xc8] sm:$0xff]
        %v486 = vld [vmem:[#allocation5 + $0xd0] sm:$0xff]
        %v487 = vld [vmem:[#allocation5 + $0xd8] sm:$0xff]
        %v488 = vld [vmem:[#allocation5 + $0xe0] sm:$0xff]
        %v489 = vld [vmem:[#allocation5 + $0xe8] sm:$0xff]
        %v490 = vld [vmem:[#allocation5 + $0xf0] sm:$0xff]
        %v491 = vld [vmem:[#allocation5 + $0xf8] sm:$0xff]
        %v492 = vld [vmem:[%s4] sm:$0x3]
        %v494 = vperm.slane %v492, 0
        %v495 = vperm.slane %v492, 1
        %v530 = vunpack.c.l.b16 %v460
        %v531 = vunpack.c.h.b16 %v460
        %v532 = vunpack.c.l.b16 %v461
        %v533 = vunpack.c.h.b16 %v461
        %v534 = vunpack.c.l.b16 %v462
        %v535 = vunpack.c.h.b16 %v462
        %v536 = vunpack.c.l.b16 %v463
        %v537 = vunpack.c.h.b16 %v463
        %v538 = vunpack.c.l.b16 %v464
        %v539 = vunpack.c.h.b16 %v464
        %v540 = vunpack.c.l.b16 %v465
        %v541 = vunpack.c.h.b16 %v465
        %v542 = vunpack.c.l.b16 %v466
        %v543 = vunpack.c.h.b16 %v466
        %v544 = vunpack.c.l.b16 %v467
        %v545 = vunpack.c.h.b16 %v467
        %v546 = vunpack.c.l.b16 %v468
        %v547 = vunpack.c.h.b16 %v468
        %v548 = vunpack.c.l.b16 %v469
        %v549 = vunpack.c.h.b16 %v469
        %v550 = vunpack.c.l.b16 %v470
        %v551 = vunpack.c.h.b16 %v470
        %v552 = vunpack.c.l.b16 %v471
        %v553 = vunpack.c.h.b16 %v471
        %v554 = vunpack.c.l.b16 %v472
        %v555 = vunpack.c.h.b16 %v472
        %v556 = vunpack.c.l.b16 %v473
        %v557 = vunpack.c.h.b16 %v473
        %v558 = vunpack.c.l.b16 %v474
        %v559 = vunpack.c.h.b16 %v474
        %v560 = vunpack.c.l.b16 %v475
        %v561 = vunpack.c.h.b16 %v475
        %v562 = vunpack.c.l.b16 %v476
        %v563 = vunpack.c.h.b16 %v476
        %v564 = vunpack.c.l.b16 %v477
        %v565 = vunpack.c.h.b16 %v477
        %v566 = vunpack.c.l.b16 %v478
        %v567 = vunpack.c.h.b16 %v478
        %v568 = vunpack.c.l.b16 %v479
        %v569 = vunpack.c.h.b16 %v479
        %v570 = vunpack.c.l.b16 %v480
        %v571 = vunpack.c.h.b16 %v480
        %v572 = vunpack.c.l.b16 %v481
        %v573 = vunpack.c.h.b16 %v481
        %v574 = vunpack.c.l.b16 %v482
        %v575 = vunpack.c.h.b16 %v482
        %v576 = vunpack.c.l.b16 %v483
        %v577 = vunpack.c.h.b16 %v483
        %v578 = vunpack.c.l.b16 %v484
        %v579 = vunpack.c.h.b16 %v484
        %v580 = vunpack.c.l.b16 %v485
        %v581 = vunpack.c.h.b16 %v485
        %v582 = vunpack.c.l.b16 %v486
        %v583 = vunpack.c.h.b16 %v486
        %v584 = vunpack.c.l.b16 %v487
        %v585 = vunpack.c.h.b16 %v487
        %v586 = vunpack.c.l.b16 %v488
        %v587 = vunpack.c.h.b16 %v488
        %v588 = vunpack.c.l.b16 %v489
        %v589 = vunpack.c.h.b16 %v489
        %v590 = vunpack.c.l.b16 %v490
        %v591 = vunpack.c.h.b16 %v490
        %v592 = vunpack.c.l.b16 %v491
        %v593 = vunpack.c.h.b16 %v491
        %v594 = vpack.c.b16 %v532, %v530
        %v595 = vpack.c.b16 %v533, %v531
        %v596 = vpack.c.b16 %v536, %v534
        %v597 = vpack.c.b16 %v537, %v535
        %v598 = vpack.c.b16 %v540, %v538
        %v599 = vpack.c.b16 %v541, %v539
        %v600 = vpack.c.b16 %v544, %v542
        %v601 = vpack.c.b16 %v545, %v543
        %v602 = vpack.c.b16 %v548, %v546
        %v603 = vpack.c.b16 %v549, %v547
        %v604 = vpack.c.b16 %v552, %v550
        %v605 = vpack.c.b16 %v553, %v551
        %v606 = vpack.c.b16 %v556, %v554
        %v607 = vpack.c.b16 %v557, %v555
        %v608 = vpack.c.b16 %v560, %v558
        %v609 = vpack.c.b16 %v561, %v559
        %v610 = vpack.c.b16 %v564, %v562
        %v611 = vpack.c.b16 %v565, %v563
        %v612 = vpack.c.b16 %v568, %v566
        %v613 = vpack.c.b16 %v569, %v567
        %v614 = vpack.c.b16 %v572, %v570
        %v615 = vpack.c.b16 %v573, %v571
        %v616 = vpack.c.b16 %v576, %v574
        %v617 = vpack.c.b16 %v577, %v575
        %v618 = vpack.c.b16 %v580, %v578
        %v619 = vpack.c.b16 %v581, %v579
        %v620 = vpack.c.b16 %v584, %v582
        %v621 = vpack.c.b16 %v585, %v583
        %v622 = vpack.c.b16 %v588, %v586
        %v623 = vpack.c.b16 %v589, %v587
        %v624 = vpack.c.b16 %v592, %v590
        %v625 = vpack.c.b16 %v593, %v591
        %658 = vmatpush.bf16.msra.mxu0 %v608
        %659 = vmatpush.bf16.msra.mxu0 %v606
        %660 = vmatpush.bf16.msra.mxu0 %v604
        %661 = vmatpush.bf16.msra.mxu0 %v602
        %662 = vmatpush.bf16.msra.mxu0 %v600
        %663 = vmatpush.bf16.msra.mxu0 %v598
        %664 = vmatpush.bf16.msra.mxu0 %v596
        %665 = vmatpush.bf16.msra.mxu0 %v594
        %666 = vmatmul.bf16.gmra.mxu0 %v458
        %v667 = vpop.f32.mrf.mxu0
        %v668 = vadd.f32 %v494, %v667
        %v669 = vpop.f32.mrf.mxu0
        %v670 = vadd.f32 %v494, %v669
        %671 = vdwg.mxu0
        %672 = vmatpush.bf16.msra.mxu0 %v624
        %673 = vmatpush.bf16.msra.mxu0 %v622
        %674 = vmatpush.bf16.msra.mxu0 %v620
        %675 = vmatpush.bf16.msra.mxu0 %v618
        %676 = vmatpush.bf16.msra.mxu0 %v616
        %677 = vmatpush.bf16.msra.mxu0 %v614
        %678 = vmatpush.bf16.msra.mxu0 %v612
        %679 = vmatpush.bf16.msra.mxu0 %v610
        %680 = vmatmul.bf16.gmra.mxu0 %v459
        %v681 = vpop.f32.mrf.mxu0
        %v682 = vadd.f32 %v668, %v681
        %v683 = vpop.f32.mrf.mxu0
        %v684 = vadd.f32 %v670, %v683
        %685 = vdwg.mxu0
        %686 = vmatpush.bf16.msra.mxu0 %v609
        %687 = vmatpush.bf16.msra.mxu0 %v607
        %688 = vmatpush.bf16.msra.mxu0 %v605
        %689 = vmatpush.bf16.msra.mxu0 %v603
        %690 = vmatpush.bf16.msra.mxu0 %v601
        %691 = vmatpush.bf16.msra.mxu0 %v599
        %692 = vmatpush.bf16.msra.mxu0 %v597
        %693 = vmatpush.bf16.msra.mxu0 %v595
        %694 = vmatmul.bf16.gmra.mxu0 %v458
        %v695 = vpop.f32.mrf.mxu0
        %v696 = vadd.f32 %v495, %v695
        %v697 = vpop.f32.mrf.mxu0
        %v698 = vadd.f32 %v495, %v697
        %699 = vdwg.mxu0
        %700 = vmatpush.bf16.msra.mxu0 %v625
        %701 = vmatpush.bf16.msra.mxu0 %v623
        %702 = vmatpush.bf16.msra.mxu0 %v621
        %703 = vmatpush.bf16.msra.mxu0 %v619
        %704 = vmatpush.bf16.msra.mxu0 %v617
        %705 = vmatpush.bf16.msra.mxu0 %v615
        %706 = vmatpush.bf16.msra.mxu0 %v613
        %707 = vmatpush.bf16.msra.mxu0 %v611
        %708 = vmatmul.bf16.gmra.mxu0 %v459
        %v709 = vpop.f32.mrf.mxu0
        %v710 = vadd.f32 %v696, %v709
        %v711 = vpop.f32.mrf.mxu0
        %v712 = vadd.f32 %v698, %v711
        %713 = vdwg.mxu0
        %v714 = vmax.f32 %v682, 0.0
        %v715 = vmax.f32 %v710, 0.0
        %v716 = vmax.f32 %v684, 0.0
        %v717 = vmax.f32 %v712, 0.0
        %v718 = vpack.c.bf16 %v716, %v714
        %v719 = vpack.c.bf16 %v717, %v715
        %v720 = vld [vmem:[%s5] sm:$0xf]
        %v721 = vld [vmem:[%s5 + $0x4] sm:$0xf]
        %v722 = vld [vmem:[%s5 + $0x8] sm:$0xf]
        %v723 = vld [vmem:[%s5 + $0xc] sm:$0xf]
        %v724 = vld [vmem:[%s5 + $0x10] sm:$0xf]
        %v725 = vld [vmem:[%s5 + $0x14] sm:$0xf]
        %v726 = vld [vmem:[%s5 + $0x18] sm:$0xf]
        %v727 = vld [vmem:[%s5 + $0x1c] sm:$0xf]
        %v728 = vld [vmem:[%s5 + $0x20] sm:$0xf]
        %v729 = vld [vmem:[%s5 + $0x24] sm:$0xf]
        %v730 = vld [vmem:[%s5 + $0x28] sm:$0xf]
        %v731 = vld [vmem:[%s5 + $0x2c] sm:$0xf]
        %v732 = vld [vmem:[%s5 + $0x30] sm:$0xf]
        %v733 = vld [vmem:[%s5 + $0x34] sm:$0xf]
        %v734 = vld [vmem:[%s5 + $0x38] sm:$0xf]
        %v735 = vld [vmem:[%s5 + $0x3c] sm:$0xf]
        %v736 = vld [vmem:[%s5 + $0x40] sm:$0xf]
        %v737 = vld [vmem:[%s5 + $0x44] sm:$0xf]
        %v738 = vld [vmem:[%s5 + $0x48] sm:$0xf]
        %v739 = vld [vmem:[%s5 + $0x4c] sm:$0xf]
        %v740 = vld [vmem:[%s5 + $0x50] sm:$0xf]
        %v741 = vld [vmem:[%s5 + $0x54] sm:$0xf]
        %v742 = vld [vmem:[%s5 + $0x58] sm:$0xf]
        %v743 = vld [vmem:[%s5 + $0x5c] sm:$0xf]
        %v744 = vld [vmem:[%s5 + $0x60] sm:$0xf]
        %v745 = vld [vmem:[%s5 + $0x64] sm:$0xf]
        %v746 = vld [vmem:[%s5 + $0x68] sm:$0xf]
        %v747 = vld [vmem:[%s5 + $0x6c] sm:$0xf]
        %v748 = vld [vmem:[%s5 + $0x70] sm:$0xf]
        %v749 = vld [vmem:[%s5 + $0x74] sm:$0xf]
        %v750 = vld [vmem:[%s5 + $0x78] sm:$0xf]
        %v751 = vld [vmem:[%s5 + $0x7c] sm:$0xf]
        %s752 = sld [smem:[#allocation2]]
        %v753 = vstv %s752
        %v786 = vunpack.c.l.b16 %v720
        %v787 = vunpack.c.l.b16 %v721
        %v788 = vunpack.c.l.b16 %v722
        %v789 = vunpack.c.l.b16 %v723
        %v790 = vunpack.c.l.b16 %v724
        %v791 = vunpack.c.l.b16 %v725
        %v792 = vunpack.c.l.b16 %v726
        %v793 = vunpack.c.l.b16 %v727
        %v794 = vunpack.c.l.b16 %v728
        %v795 = vunpack.c.l.b16 %v729
        %v796 = vunpack.c.l.b16 %v730
        %v797 = vunpack.c.l.b16 %v731
        %v798 = vunpack.c.l.b16 %v732
        %v799 = vunpack.c.l.b16 %v733
        %v800 = vunpack.c.l.b16 %v734
        %v801 = vunpack.c.l.b16 %v735
        %v802 = vunpack.c.l.b16 %v736
        %v803 = vunpack.c.l.b16 %v737
        %v804 = vunpack.c.l.b16 %v738
        %v805 = vunpack.c.l.b16 %v739
        %v806 = vunpack.c.l.b16 %v740
        %v807 = vunpack.c.l.b16 %v741
        %v808 = vunpack.c.l.b16 %v742
        %v809 = vunpack.c.l.b16 %v743
        %v810 = vunpack.c.l.b16 %v744
        %v811 = vunpack.c.l.b16 %v745
        %v812 = vunpack.c.l.b16 %v746
        %v813 = vunpack.c.l.b16 %v747
        %v814 = vunpack.c.l.b16 %v748
        %v815 = vunpack.c.l.b16 %v749
        %v816 = vunpack.c.l.b16 %v750
        %v817 = vunpack.c.l.b16 %v751
        %v818 = vpack.c.b16 %v787, %v786
        %v819 = vpack.c.b16 %v789, %v788
        %v820 = vpack.c.b16 %v791, %v790
        %v821 = vpack.c.b16 %v793, %v792
        %v822 = vpack.c.b16 %v795, %v794
        %v823 = vpack.c.b16 %v797, %v796
        %v824 = vpack.c.b16 %v799, %v798
        %v825 = vpack.c.b16 %v801, %v800
        %v826 = vpack.c.b16 %v803, %v802
        %v827 = vpack.c.b16 %v805, %v804
        %v828 = vpack.c.b16 %v807, %v806
        %v829 = vpack.c.b16 %v809, %v808
        %v830 = vpack.c.b16 %v811, %v810
        %v831 = vpack.c.b16 %v813, %v812
        %v832 = vpack.c.b16 %v815, %v814
        %v833 = vpack.c.b16 %v817, %v816
        %850 = vmatpush.bf16.msra.mxu0 %v825
        %851 = vmatpush.bf16.msra.mxu0 %v824
        %852 = vmatpush.bf16.msra.mxu0 %v823
        %853 = vmatpush.bf16.msra.mxu0 %v822
        %854 = vmatpush.bf16.msra.mxu0 %v821
        %855 = vmatpush.bf16.msra.mxu0 %v820
        %856 = vmatpush.bf16.msra.mxu0 %v819
        %857 = vmatpush.bf16.msra.mxu0 %v818
        %858 = vmatmul.bf16.gmra.mxu0 %v718
        %v859 = vpop.f32.mrf.mxu0
        %v860 = vadd.f32 %v753, %v859
        %v861 = vpop.f32.mrf.mxu0
        %v862 = vadd.f32 %v753, %v861
        %863 = vdwg.mxu0
        %864 = vmatpush.bf16.msra.mxu0 %v833
        %865 = vmatpush.bf16.msra.mxu0 %v832
        %866 = vmatpush.bf16.msra.mxu0 %v831
        %867 = vmatpush.bf16.msra.mxu0 %v830
        %868 = vmatpush.bf16.msra.mxu0 %v829
        %869 = vmatpush.bf16.msra.mxu0 %v828
        %870 = vmatpush.bf16.msra.mxu0 %v827
        %871 = vmatpush.bf16.msra.mxu0 %v826
        %872 = vmatmul.bf16.gmra.mxu0 %v719
        %v873 = vpop.f32.mrf.mxu0
        %v874 = vadd.f32 %v860, %v873
        %v875 = vpop.f32.mrf.mxu0
        %v876 = vadd.f32 %v862, %v875
        %877 = vdwg.mxu0
        %vm878 = vcmask 64512
        %879 = vst.msk [vmem:[%s319] sm:$0xff] %vm878, %v874
        %880 = vst.msk [vmem:[%s319 + $0x8] sm:$0xff] %vm878, %v876
        %s881 = smul.u32 2, %s23
        %p882 = scmp.lt.s32.totalorder %s881, 3
        %s883 = scalar_select %p882, %s881, 3
        %s884 = smul.addr %s883, 8
        %s885 = scalar_lea.vmem %s7, %s884
        // Predicated region
        $region57: #{tpu_custom_call.1} parent=47 // pred_check
          %p886 = pneg %p193
        $region58: #{tpu_custom_call.1} parent=47 // pred_check_branch
          %888 = sbr.rel (%p886) target = $region60
        $region59: #{tpu_custom_call.1} parent=47 // pred_region
          %s889 = smul.u32 2, %s23
        $region60: #{tpu_custom_call.1} parent=47 // pred_fallthru
          _
      $region48: #{tpu_custom_call.1} parent=5 // pred_fallthru
        _
      %p890 = scmp.le.s32.totalorder 2, %s18
      // Predicated region
      $region61: #{tpu_custom_call.1} parent=5 // pred_check
        %p891 = pneg %p890
      $region62: #{tpu_custom_call.1} parent=5 // pred_check_branch
        %893 = sbr.rel (%p891) target = $region64
      $region63: #{tpu_custom_call.1} parent=5 // pred_region
        %s894 = ssub.s32 %s18, 2
        // Predicated region
        $region65: #{tpu_custom_call.1} parent=63 // pred_check
          %p895 = pneg %p199
        $region66: #{tpu_custom_call.1} parent=63 // pred_check_branch
          %897 = sbr.rel (%p895) target = $region68
        $region67: #{tpu_custom_call.1} parent=63 // pred_region
          %s898 = smul.u32 2, %s24
          %p899 = scmp.lt.s32.totalorder %s898, 3
          %s900 = scalar_select %p899, %s898, 3
          %s901 = smul.addr %s900, 8
          %s902 = scalar_lea.vmem %s7, %s901
        $region68: #{tpu_custom_call.1} parent=63 // pred_fallthru
          _
      $region64: #{tpu_custom_call.1} parent=5 // pred_fallthru
        _
    $region6: #{tpu_custom_call.1} parent=1 // loop_footer
      %s22 = sadd.s32 1, %s18
    $region7: #{tpu_custom_call.1} parent=1 // loop_footer_branch
      %17 = sbr.rel target = $region3
    $region8: #{tpu_custom_call.1} parent=1 // loop_exit
      _
    %903 = vsyncpa [#allocation4], 1
    %s904 = scalar_lea.sflag [#allocation4], 1
    %905 = vsyncpa %s904, 1
    %906 = vsyncpa [#allocation6], 1

</llo_original>
